<compile_context>
chip_gen: v7x
topology: tpu7x:2x2x1
jax: 0.10.0
libtpu: 0.0.40
codegen_flags: <defaults>
</compile_context>

<pallas_src>
import functools

import jax
import jax.numpy as jnp
import numpy as np
from jax import lax
from jax.experimental import pallas as pl
from jax.experimental.pallas import tpu as pltpu


# ---------------------------------------------------------------------------
# In-kernel helpers
# ---------------------------------------------------------------------------

def _init_state(m_ref, l_ref, ps_ref, pc_ref):
    m_ref[...] = jnp.full(m_ref.shape, -jnp.inf, jnp.float32)
    l_ref[...] = jnp.zeros(l_ref.shape, jnp.float32)
    ps_ref[...] = jnp.zeros(ps_ref.shape, jnp.float32)
    pc_ref[...] = jnp.zeros(pc_ref.shape, jnp.float32)


def _online_step(logits, pos_b, col_valid, not_diag, m_ref, l_ref, ps_ref, pc_ref):
    """One flash-style online-softmax accumulation step over a [TA, TK] tile.

    logits:    [TA, TK] f32 (already scaled by 1/T, raw - no max subtracted)
    pos_b:     [TA, TK] bool  raw positive condition (diag/padding NOT yet removed)
    col_valid: [TA, TK] bool  global column < N
    not_diag:  [TA, TK] bool  global row != global column
    """
    # Running max over the FULL valid row (incl. the diagonal) - matches PyTorch.
    masked = jnp.where(col_valid, logits, -jnp.inf)
    m_prev = m_ref[...]
    m_new = jnp.maximum(m_prev, jnp.max(masked, axis=1, keepdims=True))
    alpha = jnp.exp(m_prev - m_new)                      # 0 on the first tile (m_prev=-inf)

    keep = col_valid & not_diag                          # denominator excludes self-contrast
    p = jnp.where(keep, jnp.exp(logits - m_new), 0.0)
    l_ref[...] = alpha * l_ref[...] + jnp.sum(p, axis=1, keepdims=True)
    m_ref[...] = m_new

    pos_f = (pos_b & keep).astype(jnp.float32)
    # sum(mask * (logit - max - log_denom)) = sum(mask*logit) - cnt*(max + log_denom),
    # so the raw positive-logit sum + count are sufficient statistics.
    ps_ref[...] += jnp.sum(pos_f * logits, axis=1, keepdims=True)
    pc_ref[...] += jnp.sum(pos_f, axis=1, keepdims=True)


def _finalize(out_ref, m_ref, l_ref, ps_ref, pc_ref, scale):
    log_denom = m_ref[...] + jnp.log(l_ref[...])
    cnt = jnp.maximum(pc_ref[...], 1.0)                  # guard zero-positive anchors
    mean_log_prob_pos = ps_ref[...] / cnt - log_denom    # exact divide (tiny: TA values)
    out_ref[...] = scale * mean_log_prob_pos


def _tile_masks(n_valid, tile_rows, tile_cols):
    row0 = pl.program_id(0) * tile_rows
    col0 = pl.program_id(1) * tile_cols
    row_ids = row0 + lax.broadcasted_iota(jnp.int32, (tile_rows, tile_cols), 0)
    col_ids = col0 + lax.broadcasted_iota(jnp.int32, (tile_rows, tile_cols), 1)
    col_valid = col_ids < n_valid
    not_diag = row_ids != col_ids
    return col_valid, not_diag


# ---------------------------------------------------------------------------
# Kernel bodies
# ---------------------------------------------------------------------------

def _supcon_labels_kernel(alab_ref, clab_ref, a_ref, c_ref, out_ref,
                          m_ref, l_ref, ps_ref, pc_ref, *,
                          inv_t, scale, n_valid, tile_rows, tile_cols):
    k = pl.program_id(1)

    @pl.when(k == 0)
    def _():
        _init_state(m_ref, l_ref, ps_ref, pc_ref)

    # MXU matmul in the input dtype (bf16 if provided) with f32 accumulation;
    # 1/temperature applied to the f32 logits (not to bf16 activations).
    logits = lax.dot_general(a_ref[...], c_ref[...],
                             dimension_numbers=(((1,), (1,)), ((), ())),
                             preferred_element_type=jnp.float32) * inv_t   # [TA, TK]

    col_valid, not_diag = _tile_masks(n_valid, tile_rows, tile_cols)
    # Rebuild the positive mask in-kernel from the label vectors (no HBM mask).
    pos_b = alab_ref[...] == clab_ref[...]               # [TA,1]==[1,TK] -> [TA,TK]
    _online_step(logits, pos_b, col_valid, not_diag, m_ref, l_ref, ps_ref, pc_ref)

    @pl.when(k == pl.num_programs(1) - 1)
    def _():
        _finalize(out_ref, m_ref, l_ref, ps_ref, pc_ref, scale)


def _supcon_mask_kernel(mask_ref, a_ref, c_ref, out_ref,
                        m_ref, l_ref, ps_ref, pc_ref, *,
                        inv_t, scale, n_valid, tile_rows, tile_cols):
    k = pl.program_id(1)

    @pl.when(k == 0)
    def _():
        _init_state(m_ref, l_ref, ps_ref, pc_ref)

    logits = lax.dot_general(a_ref[...], c_ref[...],
                             dimension_numbers=(((1,), (1,)), ((), ())),
                             preferred_element_type=jnp.float32) * inv_t

    col_valid, not_diag = _tile_masks(n_valid, tile_rows, tile_cols)
    pos_b = mask_ref[...].astype(jnp.int32) != 0         # int8-streamed mask
    _online_step(logits, pos_b, col_valid, not_diag, m_ref, l_ref, ps_ref, pc_ref)

    @pl.when(k == pl.num_programs(1) - 1)
    def _():
        _finalize(out_ref, m_ref, l_ref, ps_ref, pc_ref, scale)


# ---------------------------------------------------------------------------
# Tiling / wrapper helpers
# ---------------------------------------------------------------------------

def _anchor_tile_rows(a_rows):
    """Fixed 128/256-row anchor tiles; A is padded up to a multiple."""
    if a_rows <= 256:
        return 128                       # keep padding waste low for small problems
    try:
        kind = jax.devices()[0].device_kind.lower()
    except Exception:
        kind = ""
    # v5e/v4 and older have 128-wide MXUs; v6e/v7x have a 256x256 MXU.
    small_mxu = any(t in kind for t in ("v2", "v3", "v4", "v5 lite", "v5e", "v5litepod"))
    return 128 if small_mxu else 256


def _contrast_tile_cols(n_cols):
    """Column (streaming) tile over the contrast axis, multiple of 128."""
    if n_cols <= 1024:
        return max(128, ((n_cols + 127) // 128) * 128)
    return 512                           # conservative for v7x's 64 MiB VMEM


def _vmem_limit_bytes():
    try:
        cap = int(pltpu.get_tpu_info().vmem_capacity_bytes)
    except Exception:
        cap = 64 * 1024 * 1024
    # ~25% headroom for double buffers; cap at ~100 MiB on 128 MiB parts.
    return int(min(cap - cap // 4, 100 * 1024 * 1024))


def _pad_axis(x, axis, target, value=0):
    cur = x.shape[axis]
    if cur == target:
        return x
    widths = [(0, 0)] * x.ndim
    widths[axis] = (0, target - cur)
    return jnp.pad(x, widths, constant_values=value)


# ---------------------------------------------------------------------------
# Public wrapper (mirrors SupConLoss.forward)
# ---------------------------------------------------------------------------

def supcon_loss(features, labels=None, mask=None, *,
                temperature=0.07, contrast_mode='all', base_temperature=0.07):
    """features: [bsz, n_views, ...] (trailing dims flattened), labels: [bsz]."""
    features = jnp.asarray(features)
    if features.ndim < 3:
        raise ValueError('`features` needs to be [bsz, n_views, ...]')
    if features.ndim > 3:
        features = features.reshape(features.shape[0], features.shape[1], -1)
    bsz, n_views, dim = features.shape

    if labels is not None and mask is not None:
        raise ValueError('Cannot define both `labels` and `mask`')

    # contrast_feature = torch.cat(torch.unbind(features, dim=1), dim=0)
    contrast_feature = jnp.concatenate(
        [features[:, v] for v in range(n_views)], axis=0)         # [n_views*bsz, D]
    contrast_count = n_views
    if contrast_mode == 'one':
        anchor_feature = features[:, 0]
        anchor_count = 1
    elif contrast_mode == 'all':
        anchor_feature = contrast_feature
        anchor_count = contrast_count
    else:
        raise ValueError('Unknown mode: {}'.format(contrast_mode))

    A = anchor_count * bsz
    N = contrast_count * bsz
    D = dim

    TA = _anchor_tile_rows(A)
    TK = _contrast_tile_cols(N)
    A_pad = -(-A // TA) * TA
    N_pad = -(-N // TK) * TK
    num_i, num_k = A_pad // TA, N_pad // TK

    inv_t = 1.0 / float(temperature)
    scale = -(float(temperature) / float(base_temperature))

    anchor_p = _pad_axis(anchor_feature, 0, A_pad)
    contrast_p = _pad_axis(contrast_feature, 0, N_pad)

    a_spec = pl.BlockSpec((TA, D), lambda i, k: (i, 0))           # anchor tile (per i)
    c_spec = pl.BlockSpec((TK, D), lambda i, k: (k, 0))           # streamed contrast tile
    out_spec = pl.BlockSpec((TA, 1), lambda i, k: (i, 0))         # per-anchor loss
    scratch = [pltpu.VMEM((TA, 1), jnp.float32) for _ in range(4)]

    itemsize = jnp.dtype(features.dtype).itemsize
    cost = pl.CostEstimate(
        flops=int(2 * A_pad * N_pad * D + 10 * A_pad * N_pad),
        transcendentals=int(A_pad * N_pad),
        bytes_accessed=int(A_pad * D * itemsize + num_i * N_pad * D * itemsize
                           + A_pad * N_pad + 8 * (A_pad + N_pad)))
    cparams = pltpu.CompilerParams(
        dimension_semantics=("parallel", "arbitrary"),
        vmem_limit_bytes=_vmem_limit_bytes())

    common = dict(
        out_shape=jax.ShapeDtypeStruct((A_pad, 1), jnp.float32),
        grid=(num_i, num_k),
        out_specs=out_spec,
        scratch_shapes=scratch,
        compiler_params=cparams,
        cost_estimate=cost)

    if mask is None:
        # Labels path (also covers SimCLR: labels=None -> arange == eye mask).
        if labels is None:
            lab = jnp.arange(bsz, dtype=jnp.int32)
        else:
            lab = jnp.asarray(labels).reshape(-1).astype(jnp.int32)
            if lab.shape[0] != bsz:
                raise ValueError('Num of labels does not match num of features')
        clab = jnp.tile(lab, contrast_count).reshape(1, N)
        alab = (lab if anchor_count == 1 else jnp.tile(lab, anchor_count)).reshape(A, 1)
        alab = _pad_axis(alab, 0, A_pad)
        clab = _pad_axis(clab, 1, N_pad, value=-1)

        kernel = functools.partial(_supcon_labels_kernel, inv_t=inv_t, scale=scale,
                                   n_valid=N, tile_rows=TA, tile_cols=TK)
        per_anchor = pl.pallas_call(
            kernel,
            in_specs=[pl.BlockSpec((TA, 1), lambda i, k: (i, 0)),   # anchor labels
                      pl.BlockSpec((1, TK), lambda i, k: (0, k)),   # contrast labels
                      a_spec, c_spec],
            **common,
        )(alab, clab, anchor_p, contrast_p)
    else:
        # Explicit-mask path: stream an int8 mask; avoid materializing [A, N] when
        # modular row-block indexing is possible (bsz a multiple of TA).
        # TODO(synk): float-weighted masks are binarized here; the reference
        # docstring only specifies binary (same-class) masks.
        base = (jnp.asarray(mask) != 0).astype(jnp.int8)            # [bsz, bsz]
        cols = _pad_axis(jnp.tile(base, (1, contrast_count)), 1, N_pad)   # [bsz, N_pad]
        if bsz % TA == 0:
            rb = bsz // TA
            mask_arr = cols
            mask_spec = pl.BlockSpec((TA, TK), lambda i, k: (i % rb, k))
        else:
            mask_arr = _pad_axis(jnp.tile(cols, (anchor_count, 1)), 0, A_pad)
            mask_spec = pl.BlockSpec((TA, TK), lambda i, k: (i, k))

        kernel = functools.partial(_supcon_mask_kernel, inv_t=inv_t, scale=scale,
                                   n_valid=N, tile_rows=TA, tile_cols=TK)
        per_anchor = pl.pallas_call(
            kernel,
            in_specs=[mask_spec, a_spec, c_spec],
            **common,
        )(mask_arr, anchor_p, contrast_p)

    # loss.view(anchor_count, batch_size).mean() == mean over the A real anchors.
    return jnp.sum(per_anchor[:A, 0]) / A


# ---------------------------------------------------------------------------
# Pure-JAX reference (mirrors the PyTorch forward) for verification
# ---------------------------------------------------------------------------

def _supcon_loss_ref(features, labels, *, temperature=0.07, base_temperature=0.07):
    features = jnp.asarray(features, jnp.float32)
    bsz, n_views, _ = features.shape
    labels = jnp.asarray(labels).reshape(-1, 1)
    mask = (labels == labels.T).astype(jnp.float32)
    contrast_feature = jnp.concatenate(
        [features[:, v] for v in range(n_views)], axis=0)
    anchor_feature = contrast_feature
    anchor_count = contrast_count = n_views
    adc = jnp.matmul(anchor_feature, contrast_feature.T,
                     precision=lax.Precision.HIGHEST) / temperature
    logits = adc - jnp.max(adc, axis=1, keepdims=True)
    mask = jnp.tile(mask, (anchor_count, contrast_count))
    A = bsz * anchor_count
    logits_mask = 1.0 - jnp.eye(A, dtype=jnp.float32)
    mask = mask * logits_mask
    exp_logits = jnp.exp(logits) * logits_mask
    log_prob = logits - jnp.log(jnp.sum(exp_logits, axis=1, keepdims=True))
    mean_log_prob_pos = jnp.sum(mask * log_prob, axis=1) / jnp.sum(mask, axis=1)
    loss = -(temperature / base_temperature) * mean_log_prob_pos
    return jnp.mean(loss)


if __name__ == "__main__":
    key = jax.random.PRNGKey(0)
    k_feat, k_lab = jax.random.split(key)

    bsz, n_views, D = 8, 2, 32
    feats = jax.random.normal(k_feat, (bsz, n_views, D), dtype=jnp.float32)
    feats = feats / jnp.linalg.norm(feats, axis=-1, keepdims=True)
    feats = feats.astype(jnp.bfloat16)      # bf16 straight into the MXU (f32 accumulate)
    labels = jax.random.randint(k_lab, (bsz,), 0, 4)

    loss = jax.block_until_ready(
        supcon_loss(feats, labels=labels, temperature=0.07,
                    contrast_mode='all', base_temperature=0.07))
    ref = jax.block_until_ready(
        _supcon_loss_ref(feats, labels, temperature=0.07, base_temperature=0.07))
    np.testing.assert_allclose(np.asarray(loss, dtype=np.float32),
                               np.asarray(ref, dtype=np.float32),
                               rtol=1e-3, atol=1e-3)

    # Explicit-mask path: a binary label-equality mask must reproduce the same loss.
    msk = (labels[:, None] == labels[None, :]).astype(jnp.float32)
    loss_m = jax.block_until_ready(
        supcon_loss(feats, mask=msk, temperature=0.07,
                    contrast_mode='all', base_temperature=0.07))
    np.testing.assert_allclose(np.asarray(loss_m, dtype=np.float32),
                               np.asarray(ref, dtype=np.float32),
                               rtol=1e-3, atol=1e-3)

    print("KERNEL_OK")
</pallas_src>

<mosaic_0001>
module attributes {stable_mosaic.version = 11 : i64} {
  func.func @_supcon_labels_kernel(%arg0: i32, %arg1: i32, %arg2: memref<128x1xi32, #tpu.memory_space<vmem>>, %arg3: memref<1x128xi32, #tpu.memory_space<vmem>>, %arg4: memref<128x32xbf16, #tpu.memory_space<vmem>>, %arg5: memref<128x32xbf16, #tpu.memory_space<vmem>>, %arg6: memref<128x1xf32, #tpu.memory_space<vmem>>, %arg7: memref<128x1xf32, #tpu.memory_space<vmem>>, %arg8: memref<128x1xf32, #tpu.memory_space<vmem>>, %arg9: memref<128x1xf32, #tpu.memory_space<vmem>>, %arg10: memref<128x1xf32, #tpu.memory_space<vmem>>) attributes {dimension_semantics = [#tpu.dimension_semantics<parallel>, #tpu.dimension_semantics<arbitrary>], iteration_bounds = array<i64: 1, 1>, scalar_prefetch = 0 : i64, scratch_operands = 4 : i64, tpu.core_type = #tpu.core_type<tc>, window_params = [{transform_indices = @transform_0, window_bounds = array<i64: 128, 1>}, {transform_indices = @transform_1, window_bounds = array<i64: 1, 128>}, {transform_indices = @transform_2, window_bounds = array<i64: 128, 32>}, {transform_indices = @transform_3, window_bounds = array<i64: 128, 32>}, {transform_indices = @transform_4, window_bounds = array<i64: 128, 1>}]} {
    %c0_i32 = arith.constant 0 : i32
    %0 = arith.cmpi eq, %arg1, %c0_i32 : i32
    %1 = arith.extui %0 : i1 to i32
    %c0_i32_0 = arith.constant 0 : i32
    %2 = arith.cmpi ne, %1, %c0_i32_0 : i32
    scf.if %2 {
      %cst_34 = arith.constant 0xFF800000 : f32
      %62 = vector.broadcast %cst_34 : f32 to vector<128x1xf32>
      %c0_35 = arith.constant 0 : index
      %c0_36 = arith.constant 0 : index
      %63 = vector.load %arg7[%c0_35, %c0_36] : memref<128x1xf32, #tpu.memory_space<vmem>>, vector<128x1xf32>
      tpu.vector_store %arg7[%c0_35, %c0_36], %62 {strides = array<i32>} : memref<128x1xf32, #tpu.memory_space<vmem>>, vector<128x1xf32>,
      %cst_37 = arith.constant 0.000000e+00 : f32
      %64 = vector.broadcast %cst_37 : f32 to vector<128x1xf32>
      %c0_38 = arith.constant 0 : index
      %c0_39 = arith.constant 0 : index
      %65 = vector.load %arg8[%c0_38, %c0_39] : memref<128x1xf32, #tpu.memory_space<vmem>>, vector<128x1xf32>
      tpu.vector_store %arg8[%c0_38, %c0_39], %64 {strides = array<i32>} : memref<128x1xf32, #tpu.memory_space<vmem>>, vector<128x1xf32>,
      %cst_40 = arith.constant 0.000000e+00 : f32
      %66 = vector.broadcast %cst_40 : f32 to vector<128x1xf32>
      %c0_41 = arith.constant 0 : index
      %c0_42 = arith.constant 0 : index
      %67 = vector.load %arg9[%c0_41, %c0_42] : memref<128x1xf32, #tpu.memory_space<vmem>>, vector<128x1xf32>
      tpu.vector_store %arg9[%c0_41, %c0_42], %66 {strides = array<i32>} : memref<128x1xf32, #tpu.memory_space<vmem>>, vector<128x1xf32>,
      %cst_43 = arith.constant 0.000000e+00 : f32
      %68 = vector.broadcast %cst_43 : f32 to vector<128x1xf32>
      %c0_44 = arith.constant 0 : index
      %c0_45 = arith.constant 0 : index
      %69 = vector.load %arg10[%c0_44, %c0_45] : memref<128x1xf32, #tpu.memory_space<vmem>>, vector<128x1xf32>
      tpu.vector_store %arg10[%c0_44, %c0_45], %68 {strides = array<i32>} : memref<128x1xf32, #tpu.memory_space<vmem>>, vector<128x1xf32>,
    } else {
    }
    %c0 = arith.constant 0 : index
    %c0_1 = arith.constant 0 : index
    %3 = vector.load %arg4[%c0, %c0_1] : memref<128x32xbf16, #tpu.memory_space<vmem>>, vector<128x32xbf16>
    %c0_2 = arith.constant 0 : index
    %c0_3 = arith.constant 0 : index
    %4 = vector.load %arg5[%c0_2, %c0_3] : memref<128x32xbf16, #tpu.memory_space<vmem>>, vector<128x32xbf16>
    %cst = arith.constant dense<0.000000e+00> : vector<128x128xf32>
    %5 = tpu.matmul %3, %4, %cst {dimension_numbers = #tpu.dot_dimension_numbers<[1], [1], [0], [0], [0, 0, 1, 0], [], []>} : vector<128x32xbf16>, vector<128x32xbf16>, vector<128x128xf32> -> vector<128x128xf32>
    %cst_4 = arith.constant 14.2857141 : f32
    %6 = vector.broadcast %cst_4 : f32 to vector<128x128xf32>
    %7 = arith.mulf %5, %6 : vector<128x128xf32>
    %c128_i32 = arith.constant 128 : i32
    %8 = arith.muli %arg0, %c128_i32 : i32
    %c128_i32_5 = arith.constant 128 : i32
    %9 = arith.muli %arg1, %c128_i32_5 : i32
    %10 = tpu.iota {dimensions = array<i32: 0>} : vector<128x128xi32>
    %11 = vector.broadcast %8 : i32 to vector<128x128xi32>
    %12 = arith.addi %11, %10 : vector<128x128xi32>
    %13 = tpu.iota {dimensions = array<i32: 1>} : vector<128x128xi32>
    %14 = vector.broadcast %9 : i32 to vector<128x128xi32>
    %15 = arith.addi %14, %13 : vector<128x128xi32>
    %c16_i32 = arith.constant 16 : i32
    %16 = vector.broadcast %c16_i32 : i32 to vector<128x128xi32>
    %17 = arith.cmpi slt, %15, %16 : vector<128x128xi32>
    %18 = arith.cmpi ne, %12, %15 : vector<128x128xi32>
    %c0_6 = arith.constant 0 : index
    %c0_7 = arith.constant 0 : index
    %19 = vector.load %arg2[%c0_6, %c0_7] : memref<128x1xi32, #tpu.memory_space<vmem>>, vector<128x1xi32>
    %c0_8 = arith.constant 0 : index
    %c0_9 = arith.constant 0 : index
    %20 = vector.load %arg3[%c0_8, %c0_9] : memref<1x128xi32, #tpu.memory_space<vmem>>, vector<1x128xi32>
    %21 = vector.broadcast %19 : vector<128x1xi32> to vector<128x128xi32>
    %22 = vector.broadcast %20 : vector<1x128xi32> to vector<128x128xi32>
    %23 = arith.cmpi eq, %21, %22 : vector<128x128xi32>
    %cst_10 = arith.constant 0xFF800000 : f32
    %24 = vector.broadcast %cst_10 : f32 to vector<128x128xf32>
    %25 = arith.select %17, %7, %24 : vector<128x128xi1>, vector<128x128xf32>
    %c0_11 = arith.constant 0 : index
    %c0_12 = arith.constant 0 : index
    %26 = vector.load %arg7[%c0_11, %c0_12] : memref<128x1xf32, #tpu.memory_space<vmem>>, vector<128x1xf32>
    %cst_13 = arith.constant dense<0xFF800000> : vector<128xf32>
    %27 = vector.multi_reduction <maximumf>, %25, %cst_13 [1] : vector<128x128xf32> to vector<128xf32>
    %28 = vector.shape_cast %27 : vector<128xf32> to vector<128x1xf32>
    %29 = arith.maximumf %26, %28 : vector<128x1xf32>
    %30 = arith.subf %26, %29 : vector<128x1xf32>
    %31 = math.exp %30 : vector<128x1xf32>
    %32 = arith.andi %17, %18 : vector<128x128xi1>
    %33 = vector.broadcast %29 : vector<128x1xf32> to vector<128x128xf32>
    %34 = arith.subf %7, %33 : vector<128x128xf32>
    %35 = math.exp %34 : vector<128x128xf32>
    %cst_14 = arith.constant 0.000000e+00 : f32
    %36 = vector.broadcast %cst_14 : f32 to vector<128x128xf32>
    %37 = arith.select %32, %35, %36 : vector<128x128xi1>, vector<128x128xf32>
    %c0_15 = arith.constant 0 : index
    %c0_16 = arith.constant 0 : index
    %38 = vector.load %arg8[%c0_15, %c0_16] : memref<128x1xf32, #tpu.memory_space<vmem>>, vector<128x1xf32>
    %39 = arith.mulf %31, %38 : vector<128x1xf32>
    %cst_17 = arith.constant dense<0.000000e+00> : vector<128xf32>
    %40 = vector.multi_reduction <add>, %37, %cst_17 [1] : vector<128x128xf32> to vector<128xf32>
    %41 = vector.shape_cast %40 : vector<128xf32> to vector<128x1xf32>
    %42 = arith.addf %39, %41 : vector<128x1xf32>
    %c0_18 = arith.constant 0 : index
    %c0_19 = arith.constant 0 : index
    %43 = vector.load %arg8[%c0_18, %c0_19] : memref<128x1xf32, #tpu.memory_space<vmem>>, vector<128x1xf32>
    tpu.vector_store %arg8[%c0_18, %c0_19], %42 {strides = array<i32>} : memref<128x1xf32, #tpu.memory_space<vmem>>, vector<128x1xf32>,
    %c0_20 = arith.constant 0 : index
    %c0_21 = arith.constant 0 : index
    %44 = vector.load %arg7[%c0_20, %c0_21] : memref<128x1xf32, #tpu.memory_space<vmem>>, vector<128x1xf32>
    tpu.vector_store %arg7[%c0_20, %c0_21], %29 {strides = array<i32>} : memref<128x1xf32, #tpu.memory_space<vmem>>, vector<128x1xf32>,
    %45 = arith.andi %23, %32 : vector<128x128xi1>
    %46 = arith.extui %45 : vector<128x128xi1> to vector<128x128xi32>
    %47 = arith.sitofp %46 : vector<128x128xi32> to vector<128x128xf32>
    %c0_22 = arith.constant 0 : index
    %c0_23 = arith.constant 0 : index
    %48 = vector.load %arg9[%c0_22, %c0_23] : memref<128x1xf32, #tpu.memory_space<vmem>>, vector<128x1xf32>
    %49 = arith.mulf %47, %7 : vector<128x128xf32>
    %cst_24 = arith.constant dense<0.000000e+00> : vector<128xf32>
    %50 = vector.multi_reduction <add>, %49, %cst_24 [1] : vector<128x128xf32> to vector<128xf32>
    %51 = vector.shape_cast %50 : vector<128xf32> to vector<128x1xf32>
    %52 = arith.addf %48, %51 : vector<128x1xf32>
    %c0_25 = arith.constant 0 : index
    %c0_26 = arith.constant 0 : index
    %53 = vector.load %arg9[%c0_25, %c0_26] : memref<128x1xf32, #tpu.memory_space<vmem>>, vector<128x1xf32>
    tpu.vector_store %arg9[%c0_25, %c0_26], %52 {strides = array<i32>} : memref<128x1xf32, #tpu.memory_space<vmem>>, vector<128x1xf32>,
    %c0_27 = arith.constant 0 : index
    %c0_28 = arith.constant 0 : index
    %54 = vector.load %arg10[%c0_27, %c0_28] : memref<128x1xf32, #tpu.memory_space<vmem>>, vector<128x1xf32>
    %cst_29 = arith.constant dense<0.000000e+00> : vector<128xf32>
    %55 = vector.multi_reduction <add>, %47, %cst_29 [1] : vector<128x128xf32> to vector<128xf32>
    %56 = vector.shape_cast %55 : vector<128xf32> to vector<128x1xf32>
    %57 = arith.addf %54, %56 : vector<128x1xf32>
    %c0_30 = arith.constant 0 : index
    %c0_31 = arith.constant 0 : index
    %58 = vector.load %arg10[%c0_30, %c0_31] : memref<128x1xf32, #tpu.memory_space<vmem>>, vector<128x1xf32>
    tpu.vector_store %arg10[%c0_30, %c0_31], %57 {strides = array<i32>} : memref<128x1xf32, #tpu.memory_space<vmem>>, vector<128x1xf32>,
    %c0_i32_32 = arith.constant 0 : i32
    %59 = arith.cmpi eq, %arg1, %c0_i32_32 : i32
    %60 = arith.extui %59 : i1 to i32
    %c0_i32_33 = arith.constant 0 : i32
    %61 = arith.cmpi ne, %60, %c0_i32_33 : i32
    scf.if %61 {
      %c0_34 = arith.constant 0 : index
      %c0_35 = arith.constant 0 : index
      %62 = vector.load %arg7[%c0_34, %c0_35] : memref<128x1xf32, #tpu.memory_space<vmem>>, vector<128x1xf32>
      %c0_36 = arith.constant 0 : index
      %c0_37 = arith.constant 0 : index
      %63 = vector.load %arg8[%c0_36, %c0_37] : memref<128x1xf32, #tpu.memory_space<vmem>>, vector<128x1xf32>
      %64 = math.log %63 : vector<128x1xf32>
      %65 = arith.addf %62, %64 : vector<128x1xf32>
      %c0_38 = arith.constant 0 : index
      %c0_39 = arith.constant 0 : index
      %66 = vector.load %arg10[%c0_38, %c0_39] : memref<128x1xf32, #tpu.memory_space<vmem>>, vector<128x1xf32>
      %cst_40 = arith.constant 1.000000e+00 : f32
      %67 = vector.broadcast %cst_40 : f32 to vector<128x1xf32>
      %68 = arith.maximumf %66, %67 : vector<128x1xf32>
      %c0_41 = arith.constant 0 : index
      %c0_42 = arith.constant 0 : index
      %69 = vector.load %arg9[%c0_41, %c0_42] : memref<128x1xf32, #tpu.memory_space<vmem>>, vector<128x1xf32>
      %70 = arith.divf %69, %68 : vector<128x1xf32>
      %71 = arith.subf %70, %65 : vector<128x1xf32>
      %cst_43 = arith.constant -1.000000e+00 : f32
      %72 = vector.broadcast %cst_43 : f32 to vector<128x1xf32>
      %73 = arith.mulf %72, %71 : vector<128x1xf32>
      %c0_44 = arith.constant 0 : index
      %c0_45 = arith.constant 0 : index
      %74 = vector.load %arg6[%c0_44, %c0_45] : memref<128x1xf32, #tpu.memory_space<vmem>>, vector<128x1xf32>
      tpu.vector_store %arg6[%c0_44, %c0_45], %73 {strides = array<i32>} : memref<128x1xf32, #tpu.memory_space<vmem>>, vector<128x1xf32>,
    } else {
    }
    return
  }
  func.func @transform_0(%arg0: i32, %arg1: i32) -> (i32, i32) {
    %c0_i32 = arith.constant 0 : i32
    %c0_i32_0 = arith.constant 0 : i32
    return %arg0, %c0_i32 : i32, i32
  }
  func.func @transform_1(%arg0: i32, %arg1: i32) -> (i32, i32) {
    %c0_i32 = arith.constant 0 : i32
    %c0_i32_0 = arith.constant 0 : i32
    return %c0_i32, %arg1 : i32, i32
  }
  func.func @transform_2(%arg0: i32, %arg1: i32) -> (i32, i32) {
    %c0_i32 = arith.constant 0 : i32
    %c0_i32_0 = arith.constant 0 : i32
    return %arg0, %c0_i32 : i32, i32
  }
  func.func @transform_3(%arg0: i32, %arg1: i32) -> (i32, i32) {
    %c0_i32 = arith.constant 0 : i32
    %c0_i32_0 = arith.constant 0 : i32
    return %arg1, %c0_i32 : i32, i32
  }
  func.func @transform_4(%arg0: i32, %arg1: i32) -> (i32, i32) {
    %c0_i32 = arith.constant 0 : i32
    %c0_i32_0 = arith.constant 0 : i32
    return %arg0, %c0_i32 : i32, i32
  }
}

</mosaic_0001>

<llo_original>
// kernel: tpu_custom_call.1
$region0: #{tpu_custom_call.1}
  #allocation0 [shape = 'u32[]', space=smem, size = 0x4, offset = 0x4, fixed_abs, tag = 'smem constant byte address 0x4 - core index']
  #allocation1 [shape = 'u32[144,128]{1,0:T(1,128)}', space=vmem, size = 0x12000, scoped, tag = 'internal scratch']
  #allocation2 [shape = 'f32[128,1]{1,0:T(8,128)}', space=vmem, size = 0x10000, scoped, tag = 'scratch operand']
  #allocation3 [shape = 'f32[128,1]{1,0:T(8,128)}', space=vmem, size = 0x10000, scoped, tag = 'scratch operand']
  #allocation4 [shape = 'f32[128,1]{1,0:T(8,128)}', space=vmem, size = 0x10000, scoped, tag = 'scratch operand']
  #allocation5 [shape = 'f32[128,1]{1,0:T(8,128)}', space=vmem, size = 0x10000, scoped, tag = 'scratch operand']
  %s0 = inlined_call_operand.vmem [shape: s32[128,1], index: 0, kind: input, shape index: {}]
  %s1 = inlined_call_operand.vmem [shape: s32[1,128], index: 1, kind: input, shape index: {}]
  %s2 = inlined_call_operand.vmem [shape: bf16[128,32], index: 2, kind: input, shape index: {}]
  %s3 = inlined_call_operand.vmem [shape: bf16[128,32], index: 3, kind: input, shape index: {}]
  %s4 = inlined_call_operand.vmem [shape: f32[128,1], index: 4, kind: output, shape index: {}]
  %s5 = sld [smem:[#allocation0]]
  $region34: #{tpu_custom_call.1} parent=0
    _
  %s7 = ssub.s32 1, %s5
  %s8 = scalar_select 0, %s7, %s5
  // Predicated region
  $region2: #{tpu_custom_call.1} parent=0 // pred_check
    _
  $region3: #{tpu_custom_call.1} parent=0 // pred_check_branch
    %10 = sbr.rel (0) target = $region5
  $region4: #{tpu_custom_call.1} parent=0 // pred_region
    _
  $region5: #{tpu_custom_call.1} parent=0 // pred_fallthru
    _
  // Predicated region
  $region6: #{tpu_custom_call.1} parent=0 // pred_check
    _
  $region7: #{tpu_custom_call.1} parent=0 // pred_check_branch
    %12 = sbr.rel (0) target = $region9
  $region8: #{tpu_custom_call.1} parent=0 // pred_region
    _
  $region9: #{tpu_custom_call.1} parent=0 // pred_fallthru
    _
  // Predicated region
  $region10: #{tpu_custom_call.1} parent=0 // pred_check
    _
  $region11: #{tpu_custom_call.1} parent=0 // pred_check_branch
    %14 = sbr.rel (0) target = $region13
  $region12: #{tpu_custom_call.1} parent=0 // pred_region
    _
  $region13: #{tpu_custom_call.1} parent=0 // pred_fallthru
    _
  // Predicated region
  $region14: #{tpu_custom_call.1} parent=0 // pred_check
    _
  $region15: #{tpu_custom_call.1} parent=0 // pred_check_branch
    %16 = sbr.rel (0) target = $region17
  $region16: #{tpu_custom_call.1} parent=0 // pred_region
    _
  $region17: #{tpu_custom_call.1} parent=0 // pred_fallthru
    _
  %p18 = scmp.eq.s32.totalorder 0, 0
  // Predicated region
  $region18: #{tpu_custom_call.1} parent=0 // pred_check
    %p19 = pneg %p18
  $region19: #{tpu_custom_call.1} parent=0 // pred_check_branch
    %21 = sbr.rel (%p19) target = $region21
  $region20: #{tpu_custom_call.1} parent=0 // pred_region
    %vm22 = vcmask 7168
    %23 = vst.msk [vmem:[#allocation2] sm:$0xff] %vm22, -inf
    %24 = vst.msk [vmem:[#allocation2 + $0x8] sm:$0xff] %vm22, -inf
    %25 = vst.msk [vmem:[#allocation2 + $0x10] sm:$0xff] %vm22, -inf
    %26 = vst.msk [vmem:[#allocation2 + $0x18] sm:$0xff] %vm22, -inf
    %27 = vst.msk [vmem:[#allocation2 + $0x20] sm:$0xff] %vm22, -inf
    %28 = vst.msk [vmem:[#allocation2 + $0x28] sm:$0xff] %vm22, -inf
    %29 = vst.msk [vmem:[#allocation2 + $0x30] sm:$0xff] %vm22, -inf
    %30 = vst.msk [vmem:[#allocation2 + $0x38] sm:$0xff] %vm22, -inf
    %31 = vst.msk [vmem:[#allocation2 + $0x40] sm:$0xff] %vm22, -inf
    %32 = vst.msk [vmem:[#allocation2 + $0x48] sm:$0xff] %vm22, -inf
    %33 = vst.msk [vmem:[#allocation2 + $0x50] sm:$0xff] %vm22, -inf
    %34 = vst.msk [vmem:[#allocation2 + $0x58] sm:$0xff] %vm22, -inf
    %35 = vst.msk [vmem:[#allocation2 + $0x60] sm:$0xff] %vm22, -inf
    %36 = vst.msk [vmem:[#allocation2 + $0x68] sm:$0xff] %vm22, -inf
    %37 = vst.msk [vmem:[#allocation2 + $0x70] sm:$0xff] %vm22, -inf
    %38 = vst.msk [vmem:[#allocation2 + $0x78] sm:$0xff] %vm22, -inf
    %39 = vst.msk [vmem:[#allocation3] sm:$0xff] %vm22, 0.0
    %40 = vst.msk [vmem:[#allocation3 + $0x8] sm:$0xff] %vm22, 0.0
    %41 = vst.msk [vmem:[#allocation3 + $0x10] sm:$0xff] %vm22, 0.0
    %42 = vst.msk [vmem:[#allocation3 + $0x18] sm:$0xff] %vm22, 0.0
    %43 = vst.msk [vmem:[#allocation3 + $0x20] sm:$0xff] %vm22, 0.0
    %44 = vst.msk [vmem:[#allocation3 + $0x28] sm:$0xff] %vm22, 0.0
    %45 = vst.msk [vmem:[#allocation3 + $0x30] sm:$0xff] %vm22, 0.0
    %46 = vst.msk [vmem:[#allocation3 + $0x38] sm:$0xff] %vm22, 0.0
    %47 = vst.msk [vmem:[#allocation3 + $0x40] sm:$0xff] %vm22, 0.0
    %48 = vst.msk [vmem:[#allocation3 + $0x48] sm:$0xff] %vm22, 0.0
    %49 = vst.msk [vmem:[#allocation3 + $0x50] sm:$0xff] %vm22, 0.0
    %50 = vst.msk [vmem:[#allocation3 + $0x58] sm:$0xff] %vm22, 0.0
    %51 = vst.msk [vmem:[#allocation3 + $0x60] sm:$0xff] %vm22, 0.0
    %52 = vst.msk [vmem:[#allocation3 + $0x68] sm:$0xff] %vm22, 0.0
    %53 = vst.msk [vmem:[#allocation3 + $0x70] sm:$0xff] %vm22, 0.0
    %54 = vst.msk [vmem:[#allocation3 + $0x78] sm:$0xff] %vm22, 0.0
    %55 = vst.msk [vmem:[#allocation4] sm:$0xff] %vm22, 0.0
    %56 = vst.msk [vmem:[#allocation4 + $0x8] sm:$0xff] %vm22, 0.0
    %57 = vst.msk [vmem:[#allocation4 + $0x10] sm:$0xff] %vm22, 0.0
    %58 = vst.msk [vmem:[#allocation4 + $0x18] sm:$0xff] %vm22, 0.0
    %59 = vst.msk [vmem:[#allocation4 + $0x20] sm:$0xff] %vm22, 0.0
    %60 = vst.msk [vmem:[#allocation4 + $0x28] sm:$0xff] %vm22, 0.0
    %61 = vst.msk [vmem:[#allocation4 + $0x30] sm:$0xff] %vm22, 0.0
    %62 = vst.msk [vmem:[#allocation4 + $0x38] sm:$0xff] %vm22, 0.0
    %63 = vst.msk [vmem:[#allocation4 + $0x40] sm:$0xff] %vm22, 0.0
    %64 = vst.msk [vmem:[#allocation4 + $0x48] sm:$0xff] %vm22, 0.0
    %65 = vst.msk [vmem:[#allocation4 + $0x50] sm:$0xff] %vm22, 0.0
    %66 = vst.msk [vmem:[#allocation4 + $0x58] sm:$0xff] %vm22, 0.0
    %67 = vst.msk [vmem:[#allocation4 + $0x60] sm:$0xff] %vm22, 0.0
    %68 = vst.msk [vmem:[#allocation4 + $0x68] sm:$0xff] %vm22, 0.0
    %69 = vst.msk [vmem:[#allocation4 + $0x70] sm:$0xff] %vm22, 0.0
    %70 = vst.msk [vmem:[#allocation4 + $0x78] sm:$0xff] %vm22, 0.0
    %71 = vst.msk [vmem:[#allocation5] sm:$0xff] %vm22, 0.0
    %72 = vst.msk [vmem:[#allocation5 + $0x8] sm:$0xff] %vm22, 0.0
    %73 = vst.msk [vmem:[#allocation5 + $0x10] sm:$0xff] %vm22, 0.0
    %74 = vst.msk [vmem:[#allocation5 + $0x18] sm:$0xff] %vm22, 0.0
    %75 = vst.msk [vmem:[#allocation5 + $0x20] sm:$0xff] %vm22, 0.0
    %76 = vst.msk [vmem:[#allocation5 + $0x28] sm:$0xff] %vm22, 0.0
    %77 = vst.msk [vmem:[#allocation5 + $0x30] sm:$0xff] %vm22, 0.0
    %78 = vst.msk [vmem:[#allocation5 + $0x38] sm:$0xff] %vm22, 0.0
    %79 = vst.msk [vmem:[#allocation5 + $0x40] sm:$0xff] %vm22, 0.0
    %80 = vst.msk [vmem:[#allocation5 + $0x48] sm:$0xff] %vm22, 0.0
    %81 = vst.msk [vmem:[#allocation5 + $0x50] sm:$0xff] %vm22, 0.0
    %82 = vst.msk [vmem:[#allocation5 + $0x58] sm:$0xff] %vm22, 0.0
    %83 = vst.msk [vmem:[#allocation5 + $0x60] sm:$0xff] %vm22, 0.0
    %84 = vst.msk [vmem:[#allocation5 + $0x68] sm:$0xff] %vm22, 0.0
    %85 = vst.msk [vmem:[#allocation5 + $0x70] sm:$0xff] %vm22, 0.0
    %86 = vst.msk [vmem:[#allocation5 + $0x78] sm:$0xff] %vm22, 0.0
  $region21: #{tpu_custom_call.1} parent=0 // pred_fallthru
    _
  %v87 = vld [vmem:[%s2] sm:$0xf]
  %v88 = vld [vmem:[%s2 + $0x4] sm:$0xf]
  %v89 = vld [vmem:[%s2 + $0x8] sm:$0xf]
  %v90 = vld [vmem:[%s2 + $0xc] sm:$0xf]
  %v91 = vld [vmem:[%s2 + $0x10] sm:$0xf]
  %v92 = vld [vmem:[%s2 + $0x14] sm:$0xf]
  %v93 = vld [vmem:[%s2 + $0x18] sm:$0xf]
  %v94 = vld [vmem:[%s2 + $0x1c] sm:$0xf]
  %v95 = vld [vmem:[%s2 + $0x20] sm:$0xf]
  %v96 = vld [vmem:[%s2 + $0x24] sm:$0xf]
  %v97 = vld [vmem:[%s2 + $0x28] sm:$0xf]
  %v98 = vld [vmem:[%s2 + $0x2c] sm:$0xf]
  %v99 = vld [vmem:[%s2 + $0x30] sm:$0xf]
  %v100 = vld [vmem:[%s2 + $0x34] sm:$0xf]
  %v101 = vld [vmem:[%s2 + $0x38] sm:$0xf]
  %v102 = vld [vmem:[%s2 + $0x3c] sm:$0xf]
  %v103 = vld [vmem:[%s3] sm:$0xf]
  %v104 = vld [vmem:[%s3 + $0x4] sm:$0xf]
  %v105 = vld [vmem:[%s3 + $0x8] sm:$0xf]
  %v106 = vld [vmem:[%s3 + $0xc] sm:$0xf]
  %v107 = vld [vmem:[%s3 + $0x10] sm:$0xf]
  %v108 = vld [vmem:[%s3 + $0x14] sm:$0xf]
  %v109 = vld [vmem:[%s3 + $0x18] sm:$0xf]
  %v110 = vld [vmem:[%s3 + $0x1c] sm:$0xf]
  %v111 = vld [vmem:[%s3 + $0x20] sm:$0xf]
  %v112 = vld [vmem:[%s3 + $0x24] sm:$0xf]
  %v113 = vld [vmem:[%s3 + $0x28] sm:$0xf]
  %v114 = vld [vmem:[%s3 + $0x2c] sm:$0xf]
  %v115 = vld [vmem:[%s3 + $0x30] sm:$0xf]
  %v116 = vld [vmem:[%s3 + $0x34] sm:$0xf]
  %v117 = vld [vmem:[%s3 + $0x38] sm:$0xf]
  %v118 = vld [vmem:[%s3 + $0x3c] sm:$0xf]
  %v135 = vunpack.c.l.b16 %v87
  %v136 = vunpack.c.l.b16 %v88
  %v137 = vunpack.c.l.b16 %v89
  %v138 = vunpack.c.l.b16 %v90
  %v139 = vunpack.c.l.b16 %v91
  %v140 = vunpack.c.l.b16 %v92
  %v141 = vunpack.c.l.b16 %v93
  %v142 = vunpack.c.l.b16 %v94
  %v143 = vunpack.c.l.b16 %v95
  %v144 = vunpack.c.l.b16 %v96
  %v145 = vunpack.c.l.b16 %v97
  %v146 = vunpack.c.l.b16 %v98
  %v147 = vunpack.c.l.b16 %v99
  %v148 = vunpack.c.l.b16 %v100
  %v149 = vunpack.c.l.b16 %v101
  %v150 = vunpack.c.l.b16 %v102
  %v151 = vpack.c.b16 %v136, %v135
  %v152 = vpack.c.b16 %v138, %v137
  %v153 = vpack.c.b16 %v140, %v139
  %v154 = vpack.c.b16 %v142, %v141
  %v155 = vpack.c.b16 %v144, %v143
  %v156 = vpack.c.b16 %v146, %v145
  %v157 = vpack.c.b16 %v148, %v147
  %v158 = vpack.c.b16 %v150, %v149
  %v175 = vunpack.c.l.b16 %v103
  %v176 = vunpack.c.l.b16 %v104
  %v177 = vunpack.c.l.b16 %v105
  %v178 = vunpack.c.l.b16 %v106
  %v179 = vunpack.c.l.b16 %v107
  %v180 = vunpack.c.l.b16 %v108
  %v181 = vunpack.c.l.b16 %v109
  %v182 = vunpack.c.l.b16 %v110
  %v183 = vunpack.c.l.b16 %v111
  %v184 = vunpack.c.l.b16 %v112
  %v185 = vunpack.c.l.b16 %v113
  %v186 = vunpack.c.l.b16 %v114
  %v187 = vunpack.c.l.b16 %v115
  %v188 = vunpack.c.l.b16 %v116
  %v189 = vunpack.c.l.b16 %v117
  %v190 = vunpack.c.l.b16 %v118
  %v191 = vpack.c.b16 %v176, %v175
  %v192 = vpack.c.b16 %v178, %v177
  %v193 = vpack.c.b16 %v180, %v179
  %v194 = vpack.c.b16 %v182, %v181
  %v195 = vpack.c.b16 %v184, %v183
  %v196 = vpack.c.b16 %v186, %v185
  %v197 = vpack.c.b16 %v188, %v187
  %v198 = vpack.c.b16 %v190, %v189
  %vm199 = vcmask 261120
  %v201 = vsel %vm199, %v151, 0
  %v204 = vsel %vm199, %v152, 0
  %v207 = vsel %vm199, %v153, 0
  %v210 = vsel %vm199, %v154, 0
  %v213 = vsel %vm199, %v155, 0
  %v216 = vsel %vm199, %v156, 0
  %v219 = vsel %vm199, %v157, 0
  %v222 = vsel %vm199, %v158, 0
  %v225 = vsel %vm199, %v191, 0
  %v228 = vsel %vm199, %v192, 0
  %v231 = vsel %vm199, %v193, 0
  %v234 = vsel %vm199, %v194, 0
  %v237 = vsel %vm199, %v195, 0
  %v240 = vsel %vm199, %v196, 0
  %v243 = vsel %vm199, %v197, 0
  %v246 = vsel %vm199, %v198, 0
  %248 = vmatprep.subr.bf16.mxu0 0
  %249 = vmatpush1.bf16.xpose.msra.mxu0 %v225
  %250 = vmatprep.subr.bf16.mxu0 0
  %251 = vmatpush1.bf16.xpose.msra.mxu0 %v228
  %252 = vmatprep.subr.bf16.mxu0 0
  %253 = vmatpush1.bf16.xpose.msra.mxu0 %v231
  %254 = vmatprep.subr.bf16.mxu0 0
  %255 = vmatpush1.bf16.xpose.msra.mxu0 %v234
  %256 = vmatprep.subr.bf16.mxu0 0
  %257 = vmatpush1.bf16.xpose.msra.mxu0 %v237
  %258 = vmatprep.subr.bf16.mxu0 0
  %259 = vmatpush1.bf16.xpose.msra.mxu0 %v240
  %260 = vmatprep.subr.bf16.mxu0 0
  %261 = vmatpush1.bf16.xpose.msra.mxu0 %v243
  %262 = vmatprep.subr.bf16.mxu0 0
  %263 = vmatpush1.bf16.xpose.msra.mxu0 %v246
  %264 = vmatprep.subr.bf16.mxu0 0
  %265 = vmatpush1.bf16.xpose.msra.mxu0 0
  %266 = vmatprep.subr.bf16.mxu0 0
  %267 = vmatpush1.bf16.xpose.msra.mxu0 0
  %268 = vmatprep.subr.bf16.mxu0 0
  %269 = vmatpush1.bf16.xpose.msra.mxu0 0
  %270 = vmatprep.subr.bf16.mxu0 0
  %271 = vmatpush1.bf16.xpose.msra.mxu0 0
  %272 = vmatprep.subr.bf16.mxu0 0
  %273 = vmatpush1.bf16.xpose.msra.mxu0 0
  %274 = vmatprep.subr.bf16.mxu0 0
  %275 = vmatpush1.bf16.xpose.msra.mxu0 0
  %276 = vmatprep.subr.bf16.mxu0 0
  %277 = vmatpush1.bf16.xpose.msra.mxu0 0
  %278 = vmatprep.subr.bf16.mxu0 0
  %279 = vmatpush1.bf16.xpose.msra.mxu0 0
  %280 = vmatprep.mubr.bf16.mxu0 0
  %281 = vmatmul.mubr.bf16.gmra.mrb[0].mxu0 %v201
  %v282 = vpop.f32.mrb[0].mxu0
  %v283 = vadd.f32 0.0, %v282
  %v284 = vpop.f32.mrb[0].mxu0
  %v285 = vpop.f32.mrb[0].mxu0
  %v286 = vadd.f32 0.0, %v285
  %v287 = vpop.f32.mrb[0].mxu0
  %288 = vmatprep.mubr.bf16.mxu0 0
  %289 = vmatmul.mubr.bf16.gmra.mrb[0].mxu0 %v204
  %v290 = vpop.f32.mrb[0].mxu0
  %v291 = vadd.f32 0.0, %v290
  %v292 = vpop.f32.mrb[0].mxu0
  %v293 = vpop.f32.mrb[0].mxu0
  %v294 = vadd.f32 0.0, %v293
  %v295 = vpop.f32.mrb[0].mxu0
  %296 = vmatprep.mubr.bf16.mxu0 0
  %297 = vmatmul.mubr.bf16.gmra.mrb[0].mxu0 %v207
  %v298 = vpop.f32.mrb[0].mxu0
  %v299 = vadd.f32 0.0, %v298
  %v300 = vpop.f32.mrb[0].mxu0
  %v301 = vpop.f32.mrb[0].mxu0
  %v302 = vadd.f32 0.0, %v301
  %v303 = vpop.f32.mrb[0].mxu0
  %304 = vmatprep.mubr.bf16.mxu0 0
  %305 = vmatmul.mubr.bf16.gmra.mrb[0].mxu0 %v210
  %v306 = vpop.f32.mrb[0].mxu0
  %v307 = vadd.f32 0.0, %v306
  %v308 = vpop.f32.mrb[0].mxu0
  %v309 = vpop.f32.mrb[0].mxu0
  %v310 = vadd.f32 0.0, %v309
  %v311 = vpop.f32.mrb[0].mxu0
  %312 = vmatprep.mubr.bf16.mxu0 0
  %313 = vmatmul.mubr.bf16.gmra.mrb[0].mxu0 %v213
  %v314 = vpop.f32.mrb[0].mxu0
  %v315 = vadd.f32 0.0, %v314
  %v316 = vpop.f32.mrb[0].mxu0
  %v317 = vpop.f32.mrb[0].mxu0
  %v318 = vadd.f32 0.0, %v317
  %v319 = vpop.f32.mrb[0].mxu0
  %320 = vmatprep.mubr.bf16.mxu0 0
  %321 = vmatmul.mubr.bf16.gmra.mrb[0].mxu0 %v216
  %v322 = vpop.f32.mrb[0].mxu0
  %v323 = vadd.f32 0.0, %v322
  %v324 = vpop.f32.mrb[0].mxu0
  %v325 = vpop.f32.mrb[0].mxu0
  %v326 = vadd.f32 0.0, %v325
  %v327 = vpop.f32.mrb[0].mxu0
  %328 = vmatprep.mubr.bf16.mxu0 0
  %329 = vmatmul.mubr.bf16.gmra.mrb[0].mxu0 %v219
  %v330 = vpop.f32.mrb[0].mxu0
  %v331 = vadd.f32 0.0, %v330
  %v332 = vpop.f32.mrb[0].mxu0
  %v333 = vpop.f32.mrb[0].mxu0
  %v334 = vadd.f32 0.0, %v333
  %v335 = vpop.f32.mrb[0].mxu0
  %336 = vmatprep.mubr.bf16.mxu0 0
  %337 = vmatmul.mubr.bf16.gmra.mrb[0].mxu0 %v222
  %v338 = vpop.f32.mrb[0].mxu0
  %v339 = vadd.f32 0.0, %v338
  %v340 = vpop.f32.mrb[0].mxu0
  %v341 = vpop.f32.mrb[0].mxu0
  %v342 = vadd.f32 0.0, %v341
  %v343 = vpop.f32.mrb[0].mxu0
  %344 = vdwg.mxu0
  %v345 = vmul.f32 %v283, 14.285714
  %v346 = vmul.f32 %v286, 14.285714
  %v347 = vmul.f32 %v291, 14.285714
  %v348 = vmul.f32 %v294, 14.285714
  %v349 = vmul.f32 %v299, 14.285714
  %v350 = vmul.f32 %v302, 14.285714
  %v351 = vmul.f32 %v307, 14.285714
  %v352 = vmul.f32 %v310, 14.285714
  %v353 = vmul.f32 %v315, 14.285714
  %v354 = vmul.f32 %v318, 14.285714
  %v355 = vmul.f32 %v323, 14.285714
  %v356 = vmul.f32 %v326, 14.285714
  %v357 = vmul.f32 %v331, 14.285714
  %v358 = vmul.f32 %v334, 14.285714
  %v359 = vmul.f32 %v339, 14.285714
  %v360 = vmul.f32 %v342, 14.285714
  %s361 = smul.u32 0, 128
  %s362 = smul.u32 0, 128
  %v363 = vlaneseq
  %v364 = vshrl.u32 %v363, 7
  %v365 = vadd.s32 %v364, 8
  %v366 = vadd.s32 %v364, 16
  %v367 = vadd.s32 %v364, 24
  %v368 = vadd.s32 %v364, 32
  %v369 = vadd.s32 %v364, 40
  %v370 = vadd.s32 %v364, 48
  %v371 = vadd.s32 %v364, 56
  %v372 = vadd.s32 %v364, 64
  %v373 = vadd.s32 %v364, 72
  %v374 = vadd.s32 %v364, 80
  %v375 = vadd.s32 %v364, 88
  %v376 = vadd.s32 %v364, 96
  %v377 = vadd.s32 %v364, 104
  %v378 = vadd.s32 %v364, 112
  %v379 = vadd.s32 %v364, 120
  %v380 = vstv %s361
  %v381 = vadd.s32 %v380, %v364
  %v382 = vadd.s32 %v380, %v365
  %v383 = vadd.s32 %v380, %v366
  %v384 = vadd.s32 %v380, %v367
  %v385 = vadd.s32 %v380, %v368
  %v386 = vadd.s32 %v380, %v369
  %v387 = vadd.s32 %v380, %v370
  %v388 = vadd.s32 %v380, %v371
  %v389 = vadd.s32 %v380, %v372
  %v390 = vadd.s32 %v380, %v373
  %v391 = vadd.s32 %v380, %v374
  %v392 = vadd.s32 %v380, %v375
  %v393 = vadd.s32 %v380, %v376
  %v394 = vadd.s32 %v380, %v377
  %v395 = vadd.s32 %v380, %v378
  %v396 = vadd.s32 %v380, %v379
  %v397 = vlaneseq
  %v398 = vand.u32 %v397, 127
  %v399 = vstv %s362
  %v400 = vadd.s32 %v399, %v398
  %vm401 = vcmp.lt.s32.totalorder %v400, 16
  %vm402 = vcmp.ne.s32.totalorder %v381, %v400
  %vm403 = vcmp.ne.s32.totalorder %v382, %v400
  %vm404 = vcmp.ne.s32.totalorder %v383, %v400
  %vm405 = vcmp.ne.s32.totalorder %v384, %v400
  %vm406 = vcmp.ne.s32.totalorder %v385, %v400
  %vm407 = vcmp.ne.s32.totalorder %v386, %v400
  %vm408 = vcmp.ne.s32.totalorder %v387, %v400
  %vm409 = vcmp.ne.s32.totalorder %v388, %v400
  %vm410 = vcmp.ne.s32.totalorder %v389, %v400
  %vm411 = vcmp.ne.s32.totalorder %v390, %v400
  %vm412 = vcmp.ne.s32.totalorder %v391, %v400
  %vm413 = vcmp.ne.s32.totalorder %v392, %v400
  %vm414 = vcmp.ne.s32.totalorder %v393, %v400
  %vm415 = vcmp.ne.s32.totalorder %v394, %v400
  %vm416 = vcmp.ne.s32.totalorder %v395, %v400
  %vm417 = vcmp.ne.s32.totalorder %v396, %v400
  %v418 = vld [vmem:[%s0] sm:$0xff]
  %v419 = vld [vmem:[%s0 + $0x8] sm:$0xff]
  %v420 = vld [vmem:[%s0 + $0x10] sm:$0xff]
  %v421 = vld [vmem:[%s0 + $0x18] sm:$0xff]
  %v422 = vld [vmem:[%s0 + $0x20] sm:$0xff]
  %v423 = vld [vmem:[%s0 + $0x28] sm:$0xff]
  %v424 = vld [vmem:[%s0 + $0x30] sm:$0xff]
  %v425 = vld [vmem:[%s0 + $0x38] sm:$0xff]
  %v426 = vld [vmem:[%s0 + $0x40] sm:$0xff]
  %v427 = vld [vmem:[%s0 + $0x48] sm:$0xff]
  %v428 = vld [vmem:[%s0 + $0x50] sm:$0xff]
  %v429 = vld [vmem:[%s0 + $0x58] sm:$0xff]
  %v430 = vld [vmem:[%s0 + $0x60] sm:$0xff]
  %v431 = vld [vmem:[%s0 + $0x68] sm:$0xff]
  %v432 = vld [vmem:[%s0 + $0x70] sm:$0xff]
  %v433 = vld [vmem:[%s0 + $0x78] sm:$0xff]
  %v434 = vld [vmem:[%s1] sm:$0x1]
  %435 = vset.pattern.permute.xlu0 0
  %436 = vperm.xlu0 %435, %v418
  %v437 = vpop.permute.xlu0 %436
  %438 = vset.pattern.permute.xlu0 0
  %439 = vperm.xlu0 %438, %v419
  %v440 = vpop.permute.xlu0 %439
  %441 = vset.pattern.permute.xlu0 0
  %442 = vperm.xlu0 %441, %v420
  %v443 = vpop.permute.xlu0 %442
  %444 = vset.pattern.permute.xlu0 0
  %445 = vperm.xlu0 %444, %v421
  %v446 = vpop.permute.xlu0 %445
  %447 = vset.pattern.permute.xlu0 0
  %448 = vperm.xlu0 %447, %v422
  %v449 = vpop.permute.xlu0 %448
  %450 = vset.pattern.permute.xlu0 0
  %451 = vperm.xlu0 %450, %v423
  %v452 = vpop.permute.xlu0 %451
  %453 = vset.pattern.permute.xlu0 0
  %454 = vperm.xlu0 %453, %v424
  %v455 = vpop.permute.xlu0 %454
  %456 = vset.pattern.permute.xlu0 0
  %457 = vperm.xlu0 %456, %v425
  %v458 = vpop.permute.xlu0 %457
  %459 = vset.pattern.permute.xlu0 0
  %460 = vperm.xlu0 %459, %v426
  %v461 = vpop.permute.xlu0 %460
  %462 = vset.pattern.permute.xlu0 0
  %463 = vperm.xlu0 %462, %v427
  %v464 = vpop.permute.xlu0 %463
  %465 = vset.pattern.permute.xlu0 0
  %466 = vperm.xlu0 %465, %v428
  %v467 = vpop.permute.xlu0 %466
  %468 = vset.pattern.permute.xlu0 0
  %469 = vperm.xlu0 %468, %v429
  %v470 = vpop.permute.xlu0 %469
  %471 = vset.pattern.permute.xlu0 0
  %472 = vperm.xlu0 %471, %v430
  %v473 = vpop.permute.xlu0 %472
  %474 = vset.pattern.permute.xlu0 0
  %475 = vperm.xlu0 %474, %v431
  %v476 = vpop.permute.xlu0 %475
  %477 = vset.pattern.permute.xlu0 0
  %478 = vperm.xlu0 %477, %v432
  %v479 = vpop.permute.xlu0 %478
  %480 = vset.pattern.permute.xlu0 0
  %481 = vperm.xlu0 %480, %v433
  %v482 = vpop.permute.xlu0 %481
  %v483 = vlaneseq
  %v484 = vshrl.u32 %v483, 7
  %v485 = vsub.s32 0, %v484
  %v486 = vrot.slane %v434, %v485
  %vm487 = vcmp.eq.s32.totalorder %v437, %v486
  %vm488 = vcmp.eq.s32.totalorder %v440, %v486
  %vm489 = vcmp.eq.s32.totalorder %v443, %v486
  %vm490 = vcmp.eq.s32.totalorder %v446, %v486
  %vm491 = vcmp.eq.s32.totalorder %v449, %v486
  %vm492 = vcmp.eq.s32.totalorder %v452, %v486
  %vm493 = vcmp.eq.s32.totalorder %v455, %v486
  %vm494 = vcmp.eq.s32.totalorder %v458, %v486
  %vm495 = vcmp.eq.s32.totalorder %v461, %v486
  %vm496 = vcmp.eq.s32.totalorder %v464, %v486
  %vm497 = vcmp.eq.s32.totalorder %v467, %v486
  %vm498 = vcmp.eq.s32.totalorder %v470, %v486
  %vm499 = vcmp.eq.s32.totalorder %v473, %v486
  %vm500 = vcmp.eq.s32.totalorder %v476, %v486
  %vm501 = vcmp.eq.s32.totalorder %v479, %v486
  %vm502 = vcmp.eq.s32.totalorder %v482, %v486
  %v503 = vsel %vm401, %v345, -inf
  %v504 = vsel %vm401, %v346, -inf
  %v505 = vsel %vm401, %v347, -inf
  %v506 = vsel %vm401, %v348, -inf
  %v507 = vsel %vm401, %v349, -inf
  %v508 = vsel %vm401, %v350, -inf
  %v509 = vsel %vm401, %v351, -inf
  %v510 = vsel %vm401, %v352, -inf
  %v511 = vsel %vm401, %v353, -inf
  %v512 = vsel %vm401, %v354, -inf
  %v513 = vsel %vm401, %v355, -inf
  %v514 = vsel %vm401, %v356, -inf
  %v515 = vsel %vm401, %v357, -inf
  %v516 = vsel %vm401, %v358, -inf
  %v517 = vsel %vm401, %v359, -inf
  %v518 = vsel %vm401, %v360, -inf
  %v519 = vld [vmem:[#allocation2] sm:$0xff]
  %v520 = vld [vmem:[#allocation2 + $0x8] sm:$0xff]
  %v521 = vld [vmem:[#allocation2 + $0x10] sm:$0xff]
  %v522 = vld [vmem:[#allocation2 + $0x18] sm:$0xff]
  %v523 = vld [vmem:[#allocation2 + $0x20] sm:$0xff]
  %v524 = vld [vmem:[#allocation2 + $0x28] sm:$0xff]
  %v525 = vld [vmem:[#allocation2 + $0x30] sm:$0xff]
  %v526 = vld [vmem:[#allocation2 + $0x38] sm:$0xff]
  %v527 = vld [vmem:[#allocation2 + $0x40] sm:$0xff]
  %v528 = vld [vmem:[#allocation2 + $0x48] sm:$0xff]
  %v529 = vld [vmem:[#allocation2 + $0x50] sm:$0xff]
  %v530 = vld [vmem:[#allocation2 + $0x58] sm:$0xff]
  %v531 = vld [vmem:[#allocation2 + $0x60] sm:$0xff]
  %v532 = vld [vmem:[#allocation2 + $0x68] sm:$0xff]
  %v533 = vld [vmem:[#allocation2 + $0x70] sm:$0xff]
  %v534 = vld [vmem:[#allocation2 + $0x78] sm:$0xff]
  %535 = vmax.xlane.f32.xlu0 %v503
  %v536 = vpop.xlane.xlu0 %535
  %537 = vmax.xlane.f32.xlu0 %v504
  %v538 = vpop.xlane.xlu0 %537
  %539 = vmax.xlane.f32.xlu0 %v505
  %v540 = vpop.xlane.xlu0 %539
  %541 = vmax.xlane.f32.xlu0 %v506
  %v542 = vpop.xlane.xlu0 %541
  %543 = vmax.xlane.f32.xlu0 %v507
  %v544 = vpop.xlane.xlu0 %543
  %545 = vmax.xlane.f32.xlu0 %v508
  %v546 = vpop.xlane.xlu0 %545
  %547 = vmax.xlane.f32.xlu0 %v509
  %v548 = vpop.xlane.xlu0 %547
  %549 = vmax.xlane.f32.xlu0 %v510
  %v550 = vpop.xlane.xlu0 %549
  %551 = vmax.xlane.f32.xlu0 %v511
  %v552 = vpop.xlane.xlu0 %551
  %553 = vmax.xlane.f32.xlu0 %v512
  %v554 = vpop.xlane.xlu0 %553
  %555 = vmax.xlane.f32.xlu0 %v513
  %v556 = vpop.xlane.xlu0 %555
  %557 = vmax.xlane.f32.xlu0 %v514
  %v558 = vpop.xlane.xlu0 %557
  %559 = vmax.xlane.f32.xlu0 %v515
  %v560 = vpop.xlane.xlu0 %559
  %561 = vmax.xlane.f32.xlu0 %v516
  %v562 = vpop.xlane.xlu0 %561
  %563 = vmax.xlane.f32.xlu0 %v517
  %v564 = vpop.xlane.xlu0 %563
  %565 = vmax.xlane.f32.xlu0 %v518
  %v566 = vpop.xlane.xlu0 %565
  %v567 = vmax.f32 %v519, %v536
  %v568 = vmax.f32 %v520, %v538
  %v569 = vmax.f32 %v521, %v540
  %v570 = vmax.f32 %v522, %v542
  %v571 = vmax.f32 %v523, %v544
  %v572 = vmax.f32 %v524, %v546
  %v573 = vmax.f32 %v525, %v548
  %v574 = vmax.f32 %v526, %v550
  %v575 = vmax.f32 %v527, %v552
  %v576 = vmax.f32 %v528, %v554
  %v577 = vmax.f32 %v529, %v556
  %v578 = vmax.f32 %v530, %v558
  %v579 = vmax.f32 %v531, %v560
  %v580 = vmax.f32 %v532, %v562
  %v581 = vmax.f32 %v533, %v564
  %v582 = vmax.f32 %v534, %v566
  %v583 = vsub.f32 %v519, %v567
  %v584 = vsub.f32 %v520, %v568
  %v585 = vsub.f32 %v521, %v569
  %v586 = vsub.f32 %v522, %v570
  %v587 = vsub.f32 %v523, %v571
  %v588 = vsub.f32 %v524, %v572
  %v589 = vsub.f32 %v525, %v573
  %v590 = vsub.f32 %v526, %v574
  %v591 = vsub.f32 %v527, %v575
  %v592 = vsub.f32 %v528, %v576
  %v593 = vsub.f32 %v529, %v577
  %v594 = vsub.f32 %v530, %v578
  %v595 = vsub.f32 %v531, %v579
  %v596 = vsub.f32 %v532, %v580
  %v597 = vsub.f32 %v533, %v581
  %v598 = vsub.f32 %v534, %v582
  %v599 = vmul.f32 %v583, 1.442695
  %v600 = vpow.pop %v599
  %v601 = vmul.f32 %v584, 1.442695
  %v602 = vpow.pop %v601
  %v603 = vmul.f32 %v585, 1.442695
  %v604 = vpow.pop %v603
  %v605 = vmul.f32 %v586, 1.442695
  %v606 = vpow.pop %v605
  %v607 = vmul.f32 %v587, 1.442695
  %v608 = vpow.pop %v607
  %v609 = vmul.f32 %v588, 1.442695
  %v610 = vpow.pop %v609
  %v611 = vmul.f32 %v589, 1.442695
  %v612 = vpow.pop %v611
  %v613 = vmul.f32 %v590, 1.442695
  %v614 = vpow.pop %v613
  %v615 = vmul.f32 %v591, 1.442695
  %v616 = vpow.pop %v615
  %v617 = vmul.f32 %v592, 1.442695
  %v618 = vpow.pop %v617
  %v619 = vmul.f32 %v593, 1.442695
  %v620 = vpow.pop %v619
  %v621 = vmul.f32 %v594, 1.442695
  %v622 = vpow.pop %v621
  %v623 = vmul.f32 %v595, 1.442695
  %v624 = vpow.pop %v623
  %v625 = vmul.f32 %v596, 1.442695
  %v626 = vpow.pop %v625
  %v627 = vmul.f32 %v597, 1.442695
  %v628 = vpow.pop %v627
  %v629 = vmul.f32 %v598, 1.442695
  %v630 = vpow.pop %v629
  %vm631 = vmand %vm401, %vm402
  %vm632 = vmand %vm401, %vm403
  %vm633 = vmand %vm401, %vm404
  %vm634 = vmand %vm401, %vm405
  %vm635 = vmand %vm401, %vm406
  %vm636 = vmand %vm401, %vm407
  %vm637 = vmand %vm401, %vm408
  %vm638 = vmand %vm401, %vm409
  %vm639 = vmand %vm401, %vm410
  %vm640 = vmand %vm401, %vm411
  %vm641 = vmand %vm401, %vm412
  %vm642 = vmand %vm401, %vm413
  %vm643 = vmand %vm401, %vm414
  %vm644 = vmand %vm401, %vm415
  %vm645 = vmand %vm401, %vm416
  %vm646 = vmand %vm401, %vm417
  %648 = vset.pattern.permute.xlu0 0
  %649 = vperm.xlu0 %648, %v567
  %v650 = vpop.permute.xlu0 %649
  %653 = vset.pattern.permute.xlu0 0
  %654 = vperm.xlu0 %653, %v568
  %v655 = vpop.permute.xlu0 %654
  %658 = vset.pattern.permute.xlu0 0
  %659 = vperm.xlu0 %658, %v569
  %v660 = vpop.permute.xlu0 %659
  %663 = vset.pattern.permute.xlu0 0
  %664 = vperm.xlu0 %663, %v570
  %v665 = vpop.permute.xlu0 %664
  %668 = vset.pattern.permute.xlu0 0
  %669 = vperm.xlu0 %668, %v571
  %v670 = vpop.permute.xlu0 %669
  %673 = vset.pattern.permute.xlu0 0
  %674 = vperm.xlu0 %673, %v572
  %v675 = vpop.permute.xlu0 %674
  %678 = vset.pattern.permute.xlu0 0
  %679 = vperm.xlu0 %678, %v573
  %v680 = vpop.permute.xlu0 %679
  %683 = vset.pattern.permute.xlu0 0
  %684 = vperm.xlu0 %683, %v574
  %v685 = vpop.permute.xlu0 %684
  %688 = vset.pattern.permute.xlu0 0
  %689 = vperm.xlu0 %688, %v575
  %v690 = vpop.permute.xlu0 %689
  %693 = vset.pattern.permute.xlu0 0
  %694 = vperm.xlu0 %693, %v576
  %v695 = vpop.permute.xlu0 %694
  %698 = vset.pattern.permute.xlu0 0
  %699 = vperm.xlu0 %698, %v577
  %v700 = vpop.permute.xlu0 %699
  %703 = vset.pattern.permute.xlu0 0
  %704 = vperm.xlu0 %703, %v578
  %v705 = vpop.permute.xlu0 %704
  %708 = vset.pattern.permute.xlu0 0
  %709 = vperm.xlu0 %708, %v579
  %v710 = vpop.permute.xlu0 %709
  %713 = vset.pattern.permute.xlu0 0
  %714 = vperm.xlu0 %713, %v580
  %v715 = vpop.permute.xlu0 %714
  %718 = vset.pattern.permute.xlu0 0
  %719 = vperm.xlu0 %718, %v581
  %v720 = vpop.permute.xlu0 %719
  %723 = vset.pattern.permute.xlu0 0
  %724 = vperm.xlu0 %723, %v582
  %v725 = vpop.permute.xlu0 %724
  %v727 = vsub.f32 %v345, %v650
  %v728 = vsub.f32 %v346, %v655
  %v729 = vsub.f32 %v347, %v660
  %v730 = vsub.f32 %v348, %v665
  %v731 = vsub.f32 %v349, %v670
  %v732 = vsub.f32 %v350, %v675
  %v733 = vsub.f32 %v351, %v680
  %v734 = vsub.f32 %v352, %v685
  %v735 = vsub.f32 %v353, %v690
  %v736 = vsub.f32 %v354, %v695
  %v737 = vsub.f32 %v355, %v700
  %v738 = vsub.f32 %v356, %v705
  %v739 = vsub.f32 %v357, %v710
  %v740 = vsub.f32 %v358, %v715
  %v741 = vsub.f32 %v359, %v720
  %v742 = vsub.f32 %v360, %v725
  %v743 = vmul.f32 %v727, 1.442695
  %v744 = vpow.pop %v743
  %v745 = vmul.f32 %v728, 1.442695
  %v746 = vpow.pop %v745
  %v747 = vmul.f32 %v729, 1.442695
  %v748 = vpow.pop %v747
  %v749 = vmul.f32 %v730, 1.442695
  %v750 = vpow.pop %v749
  %v751 = vmul.f32 %v731, 1.442695
  %v752 = vpow.pop %v751
  %v753 = vmul.f32 %v732, 1.442695
  %v754 = vpow.pop %v753
  %v755 = vmul.f32 %v733, 1.442695
  %v756 = vpow.pop %v755
  %v757 = vmul.f32 %v734, 1.442695
  %v758 = vpow.pop %v757
  %v759 = vmul.f32 %v735, 1.442695
  %v760 = vpow.pop %v759
  %v761 = vmul.f32 %v736, 1.442695
  %v762 = vpow.pop %v761
  %v763 = vmul.f32 %v737, 1.442695
  %v764 = vpow.pop %v763
  %v765 = vmul.f32 %v738, 1.442695
  %v766 = vpow.pop %v765
  %v767 = vmul.f32 %v739, 1.442695
  %v768 = vpow.pop %v767
  %v769 = vmul.f32 %v740, 1.442695
  %v770 = vpow.pop %v769
  %v771 = vmul.f32 %v741, 1.442695
  %v772 = vpow.pop %v771
  %v773 = vmul.f32 %v742, 1.442695
  %v774 = vpow.pop %v773
  %v775 = vsel %vm631, %v744, 0.0
  %v776 = vsel %vm632, %v746, 0.0
  %v777 = vsel %vm633, %v748, 0.0
  %v778 = vsel %vm634, %v750, 0.0
  %v779 = vsel %vm635, %v752, 0.0
  %v780 = vsel %vm636, %v754, 0.0
  %v781 = vsel %vm637, %v756, 0.0
  %v782 = vsel %vm638, %v758, 0.0
  %v783 = vsel %vm639, %v760, 0.0
  %v784 = vsel %vm640, %v762, 0.0
  %v785 = vsel %vm641, %v764, 0.0
  %v786 = vsel %vm642, %v766, 0.0
  %v787 = vsel %vm643, %v768, 0.0
  %v788 = vsel %vm644, %v770, 0.0
  %v789 = vsel %vm645, %v772, 0.0
  %v790 = vsel %vm646, %v774, 0.0
  %v791 = vld [vmem:[#allocation3] sm:$0xff]
  %v792 = vld [vmem:[#allocation3 + $0x8] sm:$0xff]
  %v793 = vld [vmem:[#allocation3 + $0x10] sm:$0xff]
  %v794 = vld [vmem:[#allocation3 + $0x18] sm:$0xff]
  %v795 = vld [vmem:[#allocation3 + $0x20] sm:$0xff]
  %v796 = vld [vmem:[#allocation3 + $0x28] sm:$0xff]
  %v797 = vld [vmem:[#allocation3 + $0x30] sm:$0xff]
  %v798 = vld [vmem:[#allocation3 + $0x38] sm:$0xff]
  %v799 = vld [vmem:[#allocation3 + $0x40] sm:$0xff]
  %v800 = vld [vmem:[#allocation3 + $0x48] sm:$0xff]
  %v801 = vld [vmem:[#allocation3 + $0x50] sm:$0xff]
  %v802 = vld [vmem:[#allocation3 + $0x58] sm:$0xff]
  %v803 = vld [vmem:[#allocation3 + $0x60] sm:$0xff]
  %v804 = vld [vmem:[#allocation3 + $0x68] sm:$0xff]
  %v805 = vld [vmem:[#allocation3 + $0x70] sm:$0xff]
  %v806 = vld [vmem:[#allocation3 + $0x78] sm:$0xff]
  %v807 = vmul.f32 %v600, %v791
  %v808 = vmul.f32 %v602, %v792
  %v809 = vmul.f32 %v604, %v793
  %v810 = vmul.f32 %v606, %v794
  %v811 = vmul.f32 %v608, %v795
  %v812 = vmul.f32 %v610, %v796
  %v813 = vmul.f32 %v612, %v797
  %v814 = vmul.f32 %v614, %v798
  %v815 = vmul.f32 %v616, %v799
  %v816 = vmul.f32 %v618, %v800
  %v817 = vmul.f32 %v620, %v801
  %v818 = vmul.f32 %v622, %v802
  %v819 = vmul.f32 %v624, %v803
  %v820 = vmul.f32 %v626, %v804
  %v821 = vmul.f32 %v628, %v805
  %v822 = vmul.f32 %v630, %v806
  %823 = vadd.xlane.f32.xlu0 %v775
  %v824 = vpop.xlane.xlu0 %823
  %825 = vadd.xlane.f32.xlu0 %v776
  %v826 = vpop.xlane.xlu0 %825
  %827 = vadd.xlane.f32.xlu0 %v777
  %v828 = vpop.xlane.xlu0 %827
  %829 = vadd.xlane.f32.xlu0 %v778
  %v830 = vpop.xlane.xlu0 %829
  %831 = vadd.xlane.f32.xlu0 %v779
  %v832 = vpop.xlane.xlu0 %831
  %833 = vadd.xlane.f32.xlu0 %v780
  %v834 = vpop.xlane.xlu0 %833
  %835 = vadd.xlane.f32.xlu0 %v781
  %v836 = vpop.xlane.xlu0 %835
  %837 = vadd.xlane.f32.xlu0 %v782
  %v838 = vpop.xlane.xlu0 %837
  %839 = vadd.xlane.f32.xlu0 %v783
  %v840 = vpop.xlane.xlu0 %839
  %841 = vadd.xlane.f32.xlu0 %v784
  %v842 = vpop.xlane.xlu0 %841
  %843 = vadd.xlane.f32.xlu0 %v785
  %v844 = vpop.xlane.xlu0 %843
  %845 = vadd.xlane.f32.xlu0 %v786
  %v846 = vpop.xlane.xlu0 %845
  %847 = vadd.xlane.f32.xlu0 %v787
  %v848 = vpop.xlane.xlu0 %847
  %849 = vadd.xlane.f32.xlu0 %v788
  %v850 = vpop.xlane.xlu0 %849
  %851 = vadd.xlane.f32.xlu0 %v789
  %v852 = vpop.xlane.xlu0 %851
  %853 = vadd.xlane.f32.xlu0 %v790
  %v854 = vpop.xlane.xlu0 %853
  %v855 = vadd.f32 %v807, %v824
  %v856 = vadd.f32 %v808, %v826
  %v857 = vadd.f32 %v809, %v828
  %v858 = vadd.f32 %v810, %v830
  %v859 = vadd.f32 %v811, %v832
  %v860 = vadd.f32 %v812, %v834
  %v861 = vadd.f32 %v813, %v836
  %v862 = vadd.f32 %v814, %v838
  %v863 = vadd.f32 %v815, %v840
  %v864 = vadd.f32 %v816, %v842
  %v865 = vadd.f32 %v817, %v844
  %v866 = vadd.f32 %v818, %v846
  %v867 = vadd.f32 %v819, %v848
  %v868 = vadd.f32 %v820, %v850
  %v869 = vadd.f32 %v821, %v852
  %v870 = vadd.f32 %v822, %v854
  %vm871 = vcmask 7168
  %872 = vst.msk [vmem:[#allocation3] sm:$0xff] %vm871, %v855
  %873 = vst.msk [vmem:[#allocation3 + $0x8] sm:$0xff] %vm871, %v856
  %874 = vst.msk [vmem:[#allocation3 + $0x10] sm:$0xff] %vm871, %v857
  %875 = vst.msk [vmem:[#allocation3 + $0x18] sm:$0xff] %vm871, %v858
  %876 = vst.msk [vmem:[#allocation3 + $0x20] sm:$0xff] %vm871, %v859
  %877 = vst.msk [vmem:[#allocation3 + $0x28] sm:$0xff] %vm871, %v860
  %878 = vst.msk [vmem:[#allocation3 + $0x30] sm:$0xff] %vm871, %v861
  %879 = vst.msk [vmem:[#allocation3 + $0x38] sm:$0xff] %vm871, %v862
  %880 = vst.msk [vmem:[#allocation3 + $0x40] sm:$0xff] %vm871, %v863
  %881 = vst.msk [vmem:[#allocation3 + $0x48] sm:$0xff] %vm871, %v864
  %882 = vst.msk [vmem:[#allocation3 + $0x50] sm:$0xff] %vm871, %v865
  %883 = vst.msk [vmem:[#allocation3 + $0x58] sm:$0xff] %vm871, %v866
  %884 = vst.msk [vmem:[#allocation3 + $0x60] sm:$0xff] %vm871, %v867
  %885 = vst.msk [vmem:[#allocation3 + $0x68] sm:$0xff] %vm871, %v868
  %886 = vst.msk [vmem:[#allocation3 + $0x70] sm:$0xff] %vm871, %v869
  %887 = vst.msk [vmem:[#allocation3 + $0x78] sm:$0xff] %vm871, %v870
  %888 = vst.msk [vmem:[#allocation2] sm:$0xff] %vm871, %v567
  %889 = vst.msk [vmem:[#allocation2 + $0x8] sm:$0xff] %vm871, %v568
  %890 = vst.msk [vmem:[#allocation2 + $0x10] sm:$0xff] %vm871, %v569
  %891 = vst.msk [vmem:[#allocation2 + $0x18] sm:$0xff] %vm871, %v570
  %892 = vst.msk [vmem:[#allocation2 + $0x20] sm:$0xff] %vm871, %v571
  %893 = vst.msk [vmem:[#allocation2 + $0x28] sm:$0xff] %vm871, %v572
  %894 = vst.msk [vmem:[#allocation2 + $0x30] sm:$0xff] %vm871, %v573
  %895 = vst.msk [vmem:[#allocation2 + $0x38] sm:$0xff] %vm871, %v574
  %896 = vst.msk [vmem:[#allocation2 + $0x40] sm:$0xff] %vm871, %v575
  %897 = vst.msk [vmem:[#allocation2 + $0x48] sm:$0xff] %vm871, %v576
  %898 = vst.msk [vmem:[#allocation2 + $0x50] sm:$0xff] %vm871, %v577
  %899 = vst.msk [vmem:[#allocation2 + $0x58] sm:$0xff] %vm871, %v578
  %900 = vst.msk [vmem:[#allocation2 + $0x60] sm:$0xff] %vm871, %v579
  %901 = vst.msk [vmem:[#allocation2 + $0x68] sm:$0xff] %vm871, %v580
  %902 = vst.msk [vmem:[#allocation2 + $0x70] sm:$0xff] %vm871, %v581
  %903 = vst.msk [vmem:[#allocation2 + $0x78] sm:$0xff] %vm871, %v582
  %vm904 = vmand %vm487, %vm631
  %vm905 = vmand %vm488, %vm632
  %vm906 = vmand %vm489, %vm633
  %vm907 = vmand %vm490, %vm634
  %vm908 = vmand %vm491, %vm635
  %vm909 = vmand %vm492, %vm636
  %vm910 = vmand %vm493, %vm637
  %vm911 = vmand %vm494, %vm638
  %vm912 = vmand %vm495, %vm639
  %vm913 = vmand %vm496, %vm640
  %vm914 = vmand %vm497, %vm641
  %vm915 = vmand %vm498, %vm642
  %vm916 = vmand %vm499, %vm643
  %vm917 = vmand %vm500, %vm644
  %vm918 = vmand %vm501, %vm645
  %vm919 = vmand %vm502, %vm646
  %v920 = vsel %vm904, 1, 0
  %v921 = vsel %vm905, 1, 0
  %v922 = vsel %vm906, 1, 0
  %v923 = vsel %vm907, 1, 0
  %v924 = vsel %vm908, 1, 0
  %v925 = vsel %vm909, 1, 0
  %v926 = vsel %vm910, 1, 0
  %v927 = vsel %vm911, 1, 0
  %v928 = vsel %vm912, 1, 0
  %v929 = vsel %vm913, 1, 0
  %v930 = vsel %vm914, 1, 0
  %v931 = vsel %vm915, 1, 0
  %v932 = vsel %vm916, 1, 0
  %v933 = vsel %vm917, 1, 0
  %v934 = vsel %vm918, 1, 0
  %v935 = vsel %vm919, 1, 0
  %v936 = vcvt.s32.f32 %v920
  %v937 = vcvt.s32.f32 %v921
  %v938 = vcvt.s32.f32 %v922
  %v939 = vcvt.s32.f32 %v923
  %v940 = vcvt.s32.f32 %v924
  %v941 = vcvt.s32.f32 %v925
  %v942 = vcvt.s32.f32 %v926
  %v943 = vcvt.s32.f32 %v927
  %v944 = vcvt.s32.f32 %v928
  %v945 = vcvt.s32.f32 %v929
  %v946 = vcvt.s32.f32 %v930
  %v947 = vcvt.s32.f32 %v931
  %v948 = vcvt.s32.f32 %v932
  %v949 = vcvt.s32.f32 %v933
  %v950 = vcvt.s32.f32 %v934
  %v951 = vcvt.s32.f32 %v935
  %v952 = vld [vmem:[#allocation4] sm:$0xff]
  %v953 = vld [vmem:[#allocation4 + $0x8] sm:$0xff]
  %v954 = vld [vmem:[#allocation4 + $0x10] sm:$0xff]
  %v955 = vld [vmem:[#allocation4 + $0x18] sm:$0xff]
  %v956 = vld [vmem:[#allocation4 + $0x20] sm:$0xff]
  %v957 = vld [vmem:[#allocation4 + $0x28] sm:$0xff]
  %v958 = vld [vmem:[#allocation4 + $0x30] sm:$0xff]
  %v959 = vld [vmem:[#allocation4 + $0x38] sm:$0xff]
  %v960 = vld [vmem:[#allocation4 + $0x40] sm:$0xff]
  %v961 = vld [vmem:[#allocation4 + $0x48] sm:$0xff]
  %v962 = vld [vmem:[#allocation4 + $0x50] sm:$0xff]
  %v963 = vld [vmem:[#allocation4 + $0x58] sm:$0xff]
  %v964 = vld [vmem:[#allocation4 + $0x60] sm:$0xff]
  %v965 = vld [vmem:[#allocation4 + $0x68] sm:$0xff]
  %v966 = vld [vmem:[#allocation4 + $0x70] sm:$0xff]
  %v967 = vld [vmem:[#allocation4 + $0x78] sm:$0xff]
  %v968 = vmul.f32 %v936, %v345
  %v969 = vmul.f32 %v937, %v346
  %v970 = vmul.f32 %v938, %v347
  %v971 = vmul.f32 %v939, %v348
  %v972 = vmul.f32 %v940, %v349
  %v973 = vmul.f32 %v941, %v350
  %v974 = vmul.f32 %v942, %v351
  %v975 = vmul.f32 %v943, %v352
  %v976 = vmul.f32 %v944, %v353
  %v977 = vmul.f32 %v945, %v354
  %v978 = vmul.f32 %v946, %v355
  %v979 = vmul.f32 %v947, %v356
  %v980 = vmul.f32 %v948, %v357
  %v981 = vmul.f32 %v949, %v358
  %v982 = vmul.f32 %v950, %v359
  %v983 = vmul.f32 %v951, %v360
  %984 = vadd.xlane.f32.xlu0 %v968
  %v985 = vpop.xlane.xlu0 %984
  %986 = vadd.xlane.f32.xlu0 %v969
  %v987 = vpop.xlane.xlu0 %986
  %988 = vadd.xlane.f32.xlu0 %v970
  %v989 = vpop.xlane.xlu0 %988
  %990 = vadd.xlane.f32.xlu0 %v971
  %v991 = vpop.xlane.xlu0 %990
  %992 = vadd.xlane.f32.xlu0 %v972
  %v993 = vpop.xlane.xlu0 %992
  %994 = vadd.xlane.f32.xlu0 %v973
  %v995 = vpop.xlane.xlu0 %994
  %996 = vadd.xlane.f32.xlu0 %v974
  %v997 = vpop.xlane.xlu0 %996
  %998 = vadd.xlane.f32.xlu0 %v975
  %v999 = vpop.xlane.xlu0 %998
  %1000 = vadd.xlane.f32.xlu0 %v976
  %v1001 = vpop.xlane.xlu0 %1000
  %1002 = vadd.xlane.f32.xlu0 %v977
  %v1003 = vpop.xlane.xlu0 %1002
  %1004 = vadd.xlane.f32.xlu0 %v978
  %v1005 = vpop.xlane.xlu0 %1004
  %1006 = vadd.xlane.f32.xlu0 %v979
  %v1007 = vpop.xlane.xlu0 %1006
  %1008 = vadd.xlane.f32.xlu0 %v980
  %v1009 = vpop.xlane.xlu0 %1008
  %1010 = vadd.xlane.f32.xlu0 %v981
  %v1011 = vpop.xlane.xlu0 %1010
  %1012 = vadd.xlane.f32.xlu0 %v982
  %v1013 = vpop.xlane.xlu0 %1012
  %1014 = vadd.xlane.f32.xlu0 %v983
  %v1015 = vpop.xlane.xlu0 %1014
  %v1016 = vadd.f32 %v952, %v985
  %v1017 = vadd.f32 %v953, %v987
  %v1018 = vadd.f32 %v954, %v989
  %v1019 = vadd.f32 %v955, %v991
  %v1020 = vadd.f32 %v956, %v993
  %v1021 = vadd.f32 %v957, %v995
  %v1022 = vadd.f32 %v958, %v997
  %v1023 = vadd.f32 %v959, %v999
  %v1024 = vadd.f32 %v960, %v1001
  %v1025 = vadd.f32 %v961, %v1003
  %v1026 = vadd.f32 %v962, %v1005
  %v1027 = vadd.f32 %v963, %v1007
  %v1028 = vadd.f32 %v964, %v1009
  %v1029 = vadd.f32 %v965, %v1011
  %v1030 = vadd.f32 %v966, %v1013
  %v1031 = vadd.f32 %v967, %v1015
  %1032 = vst.msk [vmem:[#allocation4] sm:$0xff] %vm871, %v1016
  %1033 = vst.msk [vmem:[#allocation4 + $0x8] sm:$0xff] %vm871, %v1017
  %1034 = vst.msk [vmem:[#allocation4 + $0x10] sm:$0xff] %vm871, %v1018
  %1035 = vst.msk [vmem:[#allocation4 + $0x18] sm:$0xff] %vm871, %v1019
  %1036 = vst.msk [vmem:[#allocation4 + $0x20] sm:$0xff] %vm871, %v1020
  %1037 = vst.msk [vmem:[#allocation4 + $0x28] sm:$0xff] %vm871, %v1021
  %1038 = vst.msk [vmem:[#allocation4 + $0x30] sm:$0xff] %vm871, %v1022
  %1039 = vst.msk [vmem:[#allocation4 + $0x38] sm:$0xff] %vm871, %v1023
  %1040 = vst.msk [vmem:[#allocation4 + $0x40] sm:$0xff] %vm871, %v1024
  %1041 = vst.msk [vmem:[#allocation4 + $0x48] sm:$0xff] %vm871, %v1025
  %1042 = vst.msk [vmem:[#allocation4 + $0x50] sm:$0xff] %vm871, %v1026
  %1043 = vst.msk [vmem:[#allocation4 + $0x58] sm:$0xff] %vm871, %v1027
  %1044 = vst.msk [vmem:[#allocation4 + $0x60] sm:$0xff] %vm871, %v1028
  %1045 = vst.msk [vmem:[#allocation4 + $0x68] sm:$0xff] %vm871, %v1029
  %1046 = vst.msk [vmem:[#allocation4 + $0x70] sm:$0xff] %vm871, %v1030
  %1047 = vst.msk [vmem:[#allocation4 + $0x78] sm:$0xff] %vm871, %v1031
  %v1048 = vld [vmem:[#allocation5] sm:$0xff]
  %v1049 = vld [vmem:[#allocation5 + $0x8] sm:$0xff]
  %v1050 = vld [vmem:[#allocation5 + $0x10] sm:$0xff]
  %v1051 = vld [vmem:[#allocation5 + $0x18] sm:$0xff]
  %v1052 = vld [vmem:[#allocation5 + $0x20] sm:$0xff]
  %v1053 = vld [vmem:[#allocation5 + $0x28] sm:$0xff]
  %v1054 = vld [vmem:[#allocation5 + $0x30] sm:$0xff]
  %v1055 = vld [vmem:[#allocation5 + $0x38] sm:$0xff]
  %v1056 = vld [vmem:[#allocation5 + $0x40] sm:$0xff]
  %v1057 = vld [vmem:[#allocation5 + $0x48] sm:$0xff]
  %v1058 = vld [vmem:[#allocation5 + $0x50] sm:$0xff]
  %v1059 = vld [vmem:[#allocation5 + $0x58] sm:$0xff]
  %v1060 = vld [vmem:[#allocation5 + $0x60] sm:$0xff]
  %v1061 = vld [vmem:[#allocation5 + $0x68] sm:$0xff]
  %v1062 = vld [vmem:[#allocation5 + $0x70] sm:$0xff]
  %v1063 = vld [vmem:[#allocation5 + $0x78] sm:$0xff]
  %1064 = vadd.xlane.f32.xlu0 %v936
  %v1065 = vpop.xlane.xlu0 %1064
  %1066 = vadd.xlane.f32.xlu0 %v937
  %v1067 = vpop.xlane.xlu0 %1066
  %1068 = vadd.xlane.f32.xlu0 %v938
  %v1069 = vpop.xlane.xlu0 %1068
  %1070 = vadd.xlane.f32.xlu0 %v939
  %v1071 = vpop.xlane.xlu0 %1070
  %1072 = vadd.xlane.f32.xlu0 %v940
  %v1073 = vpop.xlane.xlu0 %1072
  %1074 = vadd.xlane.f32.xlu0 %v941
  %v1075 = vpop.xlane.xlu0 %1074
  %1076 = vadd.xlane.f32.xlu0 %v942
  %v1077 = vpop.xlane.xlu0 %1076
  %1078 = vadd.xlane.f32.xlu0 %v943
  %v1079 = vpop.xlane.xlu0 %1078
  %1080 = vadd.xlane.f32.xlu0 %v944
  %v1081 = vpop.xlane.xlu0 %1080
  %1082 = vadd.xlane.f32.xlu0 %v945
  %v1083 = vpop.xlane.xlu0 %1082
  %1084 = vadd.xlane.f32.xlu0 %v946
  %v1085 = vpop.xlane.xlu0 %1084
  %1086 = vadd.xlane.f32.xlu0 %v947
  %v1087 = vpop.xlane.xlu0 %1086
  %1088 = vadd.xlane.f32.xlu0 %v948
  %v1089 = vpop.xlane.xlu0 %1088
  %1090 = vadd.xlane.f32.xlu0 %v949
  %v1091 = vpop.xlane.xlu0 %1090
  %1092 = vadd.xlane.f32.xlu0 %v950
  %v1093 = vpop.xlane.xlu0 %1092
  %1094 = vadd.xlane.f32.xlu0 %v951
  %v1095 = vpop.xlane.xlu0 %1094
  %v1096 = vadd.f32 %v1048, %v1065
  %v1097 = vadd.f32 %v1049, %v1067
  %v1098 = vadd.f32 %v1050, %v1069
  %v1099 = vadd.f32 %v1051, %v1071
  %v1100 = vadd.f32 %v1052, %v1073
  %v1101 = vadd.f32 %v1053, %v1075
  %v1102 = vadd.f32 %v1054, %v1077
  %v1103 = vadd.f32 %v1055, %v1079
  %v1104 = vadd.f32 %v1056, %v1081
  %v1105 = vadd.f32 %v1057, %v1083
  %v1106 = vadd.f32 %v1058, %v1085
  %v1107 = vadd.f32 %v1059, %v1087
  %v1108 = vadd.f32 %v1060, %v1089
  %v1109 = vadd.f32 %v1061, %v1091
  %v1110 = vadd.f32 %v1062, %v1093
  %v1111 = vadd.f32 %v1063, %v1095
  %1112 = vst.msk [vmem:[#allocation5] sm:$0xff] %vm871, %v1096
  %1113 = vst.msk [vmem:[#allocation5 + $0x8] sm:$0xff] %vm871, %v1097
  %1114 = vst.msk [vmem:[#allocation5 + $0x10] sm:$0xff] %vm871, %v1098
  %1115 = vst.msk [vmem:[#allocation5 + $0x18] sm:$0xff] %vm871, %v1099
  %1116 = vst.msk [vmem:[#allocation5 + $0x20] sm:$0xff] %vm871, %v1100
  %1117 = vst.msk [vmem:[#allocation5 + $0x28] sm:$0xff] %vm871, %v1101
  %1118 = vst.msk [vmem:[#allocation5 + $0x30] sm:$0xff] %vm871, %v1102
  %1119 = vst.msk [vmem:[#allocation5 + $0x38] sm:$0xff] %vm871, %v1103
  %1120 = vst.msk [vmem:[#allocation5 + $0x40] sm:$0xff] %vm871, %v1104
  %1121 = vst.msk [vmem:[#allocation5 + $0x48] sm:$0xff] %vm871, %v1105
  %1122 = vst.msk [vmem:[#allocation5 + $0x50] sm:$0xff] %vm871, %v1106
  %1123 = vst.msk [vmem:[#allocation5 + $0x58] sm:$0xff] %vm871, %v1107
  %1124 = vst.msk [vmem:[#allocation5 + $0x60] sm:$0xff] %vm871, %v1108
  %1125 = vst.msk [vmem:[#allocation5 + $0x68] sm:$0xff] %vm871, %v1109
  %1126 = vst.msk [vmem:[#allocation5 + $0x70] sm:$0xff] %vm871, %v1110
  %1127 = vst.msk [vmem:[#allocation5 + $0x78] sm:$0xff] %vm871, %v1111
  // Predicated region
  $region22: #{tpu_custom_call.1} parent=0 // pred_check
    %p1128 = pneg %p18
  $region23: #{tpu_custom_call.1} parent=0 // pred_check_branch
    %1130 = sbr.rel (%p1128) target = $region25
  $region24: #{tpu_custom_call.1} parent=0 // pred_region
    %v1131 = vld [vmem:[#allocation2] sm:$0xff]
    %v1132 = vld [vmem:[#allocation2 + $0x8] sm:$0xff]
    %v1133 = vld [vmem:[#allocation2 + $0x10] sm:$0xff]
    %v1134 = vld [vmem:[#allocation2 + $0x18] sm:$0xff]
    %v1135 = vld [vmem:[#allocation2 + $0x20] sm:$0xff]
    %v1136 = vld [vmem:[#allocation2 + $0x28] sm:$0xff]
    %v1137 = vld [vmem:[#allocation2 + $0x30] sm:$0xff]
    %v1138 = vld [vmem:[#allocation2 + $0x38] sm:$0xff]
    %v1139 = vld [vmem:[#allocation2 + $0x40] sm:$0xff]
    %v1140 = vld [vmem:[#allocation2 + $0x48] sm:$0xff]
    %v1141 = vld [vmem:[#allocation2 + $0x50] sm:$0xff]
    %v1142 = vld [vmem:[#allocation2 + $0x58] sm:$0xff]
    %v1143 = vld [vmem:[#allocation2 + $0x60] sm:$0xff]
    %v1144 = vld [vmem:[#allocation2 + $0x68] sm:$0xff]
    %v1145 = vld [vmem:[#allocation2 + $0x70] sm:$0xff]
    %v1146 = vld [vmem:[#allocation2 + $0x78] sm:$0xff]
    %v1147 = vld [vmem:[#allocation3] sm:$0xff]
    %v1148 = vld [vmem:[#allocation3 + $0x8] sm:$0xff]
    %v1149 = vld [vmem:[#allocation3 + $0x10] sm:$0xff]
    %v1150 = vld [vmem:[#allocation3 + $0x18] sm:$0xff]
    %v1151 = vld [vmem:[#allocation3 + $0x20] sm:$0xff]
    %v1152 = vld [vmem:[#allocation3 + $0x28] sm:$0xff]
    %v1153 = vld [vmem:[#allocation3 + $0x30] sm:$0xff]
    %v1154 = vld [vmem:[#allocation3 + $0x38] sm:$0xff]
    %v1155 = vld [vmem:[#allocation3 + $0x40] sm:$0xff]
    %v1156 = vld [vmem:[#allocation3 + $0x48] sm:$0xff]
    %v1157 = vld [vmem:[#allocation3 + $0x50] sm:$0xff]
    %v1158 = vld [vmem:[#allocation3 + $0x58] sm:$0xff]
    %v1159 = vld [vmem:[#allocation3 + $0x60] sm:$0xff]
    %v1160 = vld [vmem:[#allocation3 + $0x68] sm:$0xff]
    %v1161 = vld [vmem:[#allocation3 + $0x70] sm:$0xff]
    %v1162 = vld [vmem:[#allocation3 + $0x78] sm:$0xff]
    %v1163 = vlog2.pop %v1147
    %v1164 = vmul.f32 %v1163, 0.6931472
    %v1165 = vlog2.pop %v1148
    %v1166 = vmul.f32 %v1165, 0.6931472
    %v1167 = vlog2.pop %v1149
    %v1168 = vmul.f32 %v1167, 0.6931472
    %v1169 = vlog2.pop %v1150
    %v1170 = vmul.f32 %v1169, 0.6931472
    %v1171 = vlog2.pop %v1151
    %v1172 = vmul.f32 %v1171, 0.6931472
    %v1173 = vlog2.pop %v1152
    %v1174 = vmul.f32 %v1173, 0.6931472
    %v1175 = vlog2.pop %v1153
    %v1176 = vmul.f32 %v1175, 0.6931472
    %v1177 = vlog2.pop %v1154
    %v1178 = vmul.f32 %v1177, 0.6931472
    %v1179 = vlog2.pop %v1155
    %v1180 = vmul.f32 %v1179, 0.6931472
    %v1181 = vlog2.pop %v1156
    %v1182 = vmul.f32 %v1181, 0.6931472
    %v1183 = vlog2.pop %v1157
    %v1184 = vmul.f32 %v1183, 0.6931472
    %v1185 = vlog2.pop %v1158
    %v1186 = vmul.f32 %v1185, 0.6931472
    %v1187 = vlog2.pop %v1159
    %v1188 = vmul.f32 %v1187, 0.6931472
    %v1189 = vlog2.pop %v1160
    %v1190 = vmul.f32 %v1189, 0.6931472
    %v1191 = vlog2.pop %v1161
    %v1192 = vmul.f32 %v1191, 0.6931472
    %v1193 = vlog2.pop %v1162
    %v1194 = vmul.f32 %v1193, 0.6931472
    %v1195 = vadd.f32 %v1131, %v1164
    %v1196 = vadd.f32 %v1132, %v1166
    %v1197 = vadd.f32 %v1133, %v1168
    %v1198 = vadd.f32 %v1134, %v1170
    %v1199 = vadd.f32 %v1135, %v1172
    %v1200 = vadd.f32 %v1136, %v1174
    %v1201 = vadd.f32 %v1137, %v1176
    %v1202 = vadd.f32 %v1138, %v1178
    %v1203 = vadd.f32 %v1139, %v1180
    %v1204 = vadd.f32 %v1140, %v1182
    %v1205 = vadd.f32 %v1141, %v1184
    %v1206 = vadd.f32 %v1142, %v1186
    %v1207 = vadd.f32 %v1143, %v1188
    %v1208 = vadd.f32 %v1144, %v1190
    %v1209 = vadd.f32 %v1145, %v1192
    %v1210 = vadd.f32 %v1146, %v1194
    %v1211 = vld [vmem:[#allocation5] sm:$0xff]
    %v1212 = vld [vmem:[#allocation5 + $0x8] sm:$0xff]
    %v1213 = vld [vmem:[#allocation5 + $0x10] sm:$0xff]
    %v1214 = vld [vmem:[#allocation5 + $0x18] sm:$0xff]
    %v1215 = vld [vmem:[#allocation5 + $0x20] sm:$0xff]
    %v1216 = vld [vmem:[#allocation5 + $0x28] sm:$0xff]
    %v1217 = vld [vmem:[#allocation5 + $0x30] sm:$0xff]
    %v1218 = vld [vmem:[#allocation5 + $0x38] sm:$0xff]
    %v1219 = vld [vmem:[#allocation5 + $0x40] sm:$0xff]
    %v1220 = vld [vmem:[#allocation5 + $0x48] sm:$0xff]
    %v1221 = vld [vmem:[#allocation5 + $0x50] sm:$0xff]
    %v1222 = vld [vmem:[#allocation5 + $0x58] sm:$0xff]
    %v1223 = vld [vmem:[#allocation5 + $0x60] sm:$0xff]
    %v1224 = vld [vmem:[#allocation5 + $0x68] sm:$0xff]
    %v1225 = vld [vmem:[#allocation5 + $0x70] sm:$0xff]
    %v1226 = vld [vmem:[#allocation5 + $0x78] sm:$0xff]
    %v1227 = vmax.f32 %v1211, 1.0
    %v1228 = vmax.f32 %v1212, 1.0
    %v1229 = vmax.f32 %v1213, 1.0
    %v1230 = vmax.f32 %v1214, 1.0
    %v1231 = vmax.f32 %v1215, 1.0
    %v1232 = vmax.f32 %v1216, 1.0
    %v1233 = vmax.f32 %v1217, 1.0
    %v1234 = vmax.f32 %v1218, 1.0
    %v1235 = vmax.f32 %v1219, 1.0
    %v1236 = vmax.f32 %v1220, 1.0
    %v1237 = vmax.f32 %v1221, 1.0
    %v1238 = vmax.f32 %v1222, 1.0
    %v1239 = vmax.f32 %v1223, 1.0
    %v1240 = vmax.f32 %v1224, 1.0
    %v1241 = vmax.f32 %v1225, 1.0
    %v1242 = vmax.f32 %v1226, 1.0
    %v1243 = vld [vmem:[#allocation4] sm:$0xff]
    %v1244 = vld [vmem:[#allocation4 + $0x8] sm:$0xff]
    %v1245 = vld [vmem:[#allocation4 + $0x10] sm:$0xff]
    %v1246 = vld [vmem:[#allocation4 + $0x18] sm:$0xff]
    %v1247 = vld [vmem:[#allocation4 + $0x20] sm:$0xff]
    %v1248 = vld [vmem:[#allocation4 + $0x28] sm:$0xff]
    %v1249 = vld [vmem:[#allocation4 + $0x30] sm:$0xff]
    %v1250 = vld [vmem:[#allocation4 + $0x38] sm:$0xff]
    %v1251 = vld [vmem:[#allocation4 + $0x40] sm:$0xff]
    %v1252 = vld [vmem:[#allocation4 + $0x48] sm:$0xff]
    %v1253 = vld [vmem:[#allocation4 + $0x50] sm:$0xff]
    %v1254 = vld [vmem:[#allocation4 + $0x58] sm:$0xff]
    %v1255 = vld [vmem:[#allocation4 + $0x60] sm:$0xff]
    %v1256 = vld [vmem:[#allocation4 + $0x68] sm:$0xff]
    %v1257 = vld [vmem:[#allocation4 + $0x70] sm:$0xff]
    %v1258 = vld [vmem:[#allocation4 + $0x78] sm:$0xff]
    %v1259 = vrcp.pop %v1227
    %v1260 = vmul.f32 %v1243, %v1259
    %v1261 = vrcp.pop %v1228
    %v1262 = vmul.f32 %v1244, %v1261
    %v1263 = vrcp.pop %v1229
    %v1264 = vmul.f32 %v1245, %v1263
    %v1265 = vrcp.pop %v1230
    %v1266 = vmul.f32 %v1246, %v1265
    %v1267 = vrcp.pop %v1231
    %v1268 = vmul.f32 %v1247, %v1267
    %v1269 = vrcp.pop %v1232
    %v1270 = vmul.f32 %v1248, %v1269
    %v1271 = vrcp.pop %v1233
    %v1272 = vmul.f32 %v1249, %v1271
    %v1273 = vrcp.pop %v1234
    %v1274 = vmul.f32 %v1250, %v1273
    %v1275 = vrcp.pop %v1235
    %v1276 = vmul.f32 %v1251, %v1275
    %v1277 = vrcp.pop %v1236
    %v1278 = vmul.f32 %v1252, %v1277
    %v1279 = vrcp.pop %v1237
    %v1280 = vmul.f32 %v1253, %v1279
    %v1281 = vrcp.pop %v1238
    %v1282 = vmul.f32 %v1254, %v1281
    %v1283 = vrcp.pop %v1239
    %v1284 = vmul.f32 %v1255, %v1283
    %v1285 = vrcp.pop %v1240
    %v1286 = vmul.f32 %v1256, %v1285
    %v1287 = vrcp.pop %v1241
    %v1288 = vmul.f32 %v1257, %v1287
    %v1289 = vrcp.pop %v1242
    %v1290 = vmul.f32 %v1258, %v1289
    %v1291 = vsub.f32 %v1260, %v1195
    %v1292 = vsub.f32 %v1262, %v1196
    %v1293 = vsub.f32 %v1264, %v1197
    %v1294 = vsub.f32 %v1266, %v1198
    %v1295 = vsub.f32 %v1268, %v1199
    %v1296 = vsub.f32 %v1270, %v1200
    %v1297 = vsub.f32 %v1272, %v1201
    %v1298 = vsub.f32 %v1274, %v1202
    %v1299 = vsub.f32 %v1276, %v1203
    %v1300 = vsub.f32 %v1278, %v1204
    %v1301 = vsub.f32 %v1280, %v1205
    %v1302 = vsub.f32 %v1282, %v1206
    %v1303 = vsub.f32 %v1284, %v1207
    %v1304 = vsub.f32 %v1286, %v1208
    %v1305 = vsub.f32 %v1288, %v1209
    %v1306 = vsub.f32 %v1290, %v1210
    %v1307 = vmul.f32 %v1291, -1.0
    %v1308 = vmul.f32 %v1292, -1.0
    %v1309 = vmul.f32 %v1293, -1.0
    %v1310 = vmul.f32 %v1294, -1.0
    %v1311 = vmul.f32 %v1295, -1.0
    %v1312 = vmul.f32 %v1296, -1.0
    %v1313 = vmul.f32 %v1297, -1.0
    %v1314 = vmul.f32 %v1298, -1.0
    %v1315 = vmul.f32 %v1299, -1.0
    %v1316 = vmul.f32 %v1300, -1.0
    %v1317 = vmul.f32 %v1301, -1.0
    %v1318 = vmul.f32 %v1302, -1.0
    %v1319 = vmul.f32 %v1303, -1.0
    %v1320 = vmul.f32 %v1304, -1.0
    %v1321 = vmul.f32 %v1305, -1.0
    %v1322 = vmul.f32 %v1306, -1.0
    %1323 = vst.msk [vmem:[%s4] sm:$0xff] %vm871, %v1307
    %1324 = vst.msk [vmem:[%s4 + $0x8] sm:$0xff] %vm871, %v1308
    %1325 = vst.msk [vmem:[%s4 + $0x10] sm:$0xff] %vm871, %v1309
    %1326 = vst.msk [vmem:[%s4 + $0x18] sm:$0xff] %vm871, %v1310
    %1327 = vst.msk [vmem:[%s4 + $0x20] sm:$0xff] %vm871, %v1311
    %1328 = vst.msk [vmem:[%s4 + $0x28] sm:$0xff] %vm871, %v1312
    %1329 = vst.msk [vmem:[%s4 + $0x30] sm:$0xff] %vm871, %v1313
    %1330 = vst.msk [vmem:[%s4 + $0x38] sm:$0xff] %vm871, %v1314
    %1331 = vst.msk [vmem:[%s4 + $0x40] sm:$0xff] %vm871, %v1315
    %1332 = vst.msk [vmem:[%s4 + $0x48] sm:$0xff] %vm871, %v1316
    %1333 = vst.msk [vmem:[%s4 + $0x50] sm:$0xff] %vm871, %v1317
    %1334 = vst.msk [vmem:[%s4 + $0x58] sm:$0xff] %vm871, %v1318
    %1335 = vst.msk [vmem:[%s4 + $0x60] sm:$0xff] %vm871, %v1319
    %1336 = vst.msk [vmem:[%s4 + $0x68] sm:$0xff] %vm871, %v1320
    %1337 = vst.msk [vmem:[%s4 + $0x70] sm:$0xff] %vm871, %v1321
    %1338 = vst.msk [vmem:[%s4 + $0x78] sm:$0xff] %vm871, %v1322
  $region25: #{tpu_custom_call.1} parent=0 // pred_fallthru
    _
  // Predicated region
  $region26: #{tpu_custom_call.1} parent=0 // pred_check
    _
  $region27: #{tpu_custom_call.1} parent=0 // pred_check_branch
    %1340 = sbr.rel (0) target = $region29
  $region28: #{tpu_custom_call.1} parent=0 // pred_region
    _
  $region29: #{tpu_custom_call.1} parent=0 // pred_fallthru
    _
  // Predicated region
  $region30: #{tpu_custom_call.1} parent=0 // pred_check
    _
  $region31: #{tpu_custom_call.1} parent=0 // pred_check_branch
    %1342 = sbr.rel (0) target = $region33
  $region32: #{tpu_custom_call.1} parent=0 // pred_region
    _
  $region33: #{tpu_custom_call.1} parent=0 // pred_fallthru
    _

</llo_original>
